<compile_context>
chip_gen: v7x
topology: tpu7x:2x2x1
jax: 0.10.0
libtpu: 0.0.40
codegen_flags: <defaults>
</compile_context>

<pallas_src>
import functools

import jax
import jax.numpy as jnp
from jax import lax
from jax.experimental import pallas as pl
from jax.experimental.pallas import tpu as pltpu

ALPHA = 0.2          # LeakyReLU negative slope used by THGAT
NEG_BIG = -9.0e15    # the "zero_vec" fill used before the masked softmax
BN_EPS = 1e-5        # nn.BatchNorm1d default eps (training-mode batch stats, gamma=1, beta=0)


# ---------------------------------------------------------------------------
# Fused BiTHGAT kernel: one grid point == one direction (0: forward, 1: backward,
# time-reversed).  Per processing step t (dense equivalent of the torch THGAT):
#   h[b,n]    = w_x*x + w_m*m + w_n*pri_n + sum_j w_hj*h_bn[j] + bias[n]
#   edge[e,b] = weight2^T @ ((incT @ h^T) / deg)          (kept edge-major)
#   pair      = lrelu(a0*h[n] + a1*edge[e]);  time[e] = lrelu(a2_0*edge[e] + <hist, a2[1:]>)
#   score     = lrelu(a3_0*time[e] + a3_1*pair)
#   att       = softmax_over_n( where(inc>0, score, -9e15) );  xs_hat[n] = sum_e att*edge
# Fused epilogue: xs_mix blend with observed values + fresh training-mode BatchNorm1d;
# node / edge histories and the previous-imputation mean are carried in VMEM scratch.
# ---------------------------------------------------------------------------
def _bithgat_kernel(S, B, N, E,
                    x_ref, m_ref, incT_ref, invdeg_ref, bias_ref, w2T_ref,
                    coef_ref, wpad_ref, a2w_ref,
                    out_ref,
                    h_hist, e_hist, mean_sc):
    d = pl.program_id(0)

    # Re-initialise carried state for this direction (scratch persists across grid points).
    h_hist[...] = jnp.zeros_like(h_hist)
    e_hist[...] = jnp.zeros_like(e_hist)
    mean_sc[...] = jnp.zeros_like(mean_sc)

    # Loop-invariant operands, hoisted out of the time loop.
    incT = incT_ref[...]                 # (E, N) incidence, edge-major
    inc_pos = incT > 0.0                 # (E, N) attention mask (hoisted)
    inv_deg = invdeg_ref[...]            # (E, 1) exact 1/deg, precomputed in the wrapper
    bias = bias_ref[...]                 # (1, N)

    def lrelu(v):
        return jnp.where(v > 0, v, ALPHA * v)

    @pl.loop(0, S)
    def _step(t):
        # Forward processes time t; backward processes time S-1-t and writes its result
        # back at that source index, so both outputs land in original time order.
        src = jnp.where(d == 0, t, S - 1 - t)
        row = d * S + t                  # row into the per-direction packed scalar tables

        a0 = coef_ref[row, 0]
        a1 = coef_ref[row, 1]
        a2_0 = coef_ref[row, 2]
        a3_0 = coef_ref[row, 3]
        a3_1 = coef_ref[row, 4]
        w_x = coef_ref[row, 5]
        w_m = coef_ref[row, 6]
        w_n = coef_ref[row, 7]

        x_t = x_ref[src]                 # (B, N)
        m_t = m_ref[src]                 # (B, N)

        # pri_n ('mean' init): zeros at step 0, previous-imputation-mean fill afterwards.
        have_prev = (t > 0).astype(jnp.float32)
        n_s = have_prev * jnp.where(x_t == 0.0, mean_sc[...], x_t)          # (B, N)

        # Node projection + history blends (bounded at t; weights packed per step).
        h_val = w_x * x_t + w_m * m_t + w_n * n_s + bias                    # (B, N)

        def hist_body(j, carry):
            hv, pr = carry
            hv = hv + wpad_ref[row, j] * h_hist[j]
            pr = pr + a2w_ref[row, j] * e_hist[j]
            return hv, pr

        h_val, priT = lax.fori_loop(
            0, t, hist_body, (h_val, jnp.zeros((E, B), jnp.float32)))

        # Hyper-edge features, edge-major (E, B).  Zero-degree hyper-edges would produce
        # Inf/NaN here exactly like the torch reference does.
        edge0T = jnp.einsum('en,bn->eb', incT, h_val,
                            preferred_element_type=jnp.float32) * inv_deg   # (E, B)  MXU
        edgeT = jnp.dot(w2T_ref[t], edge0T,
                        preferred_element_type=jnp.float32)                 # (E, B)  MXU

        # Attention + aggregation.  B is tiny; the per-b unroll keeps every operand a
        # native (E,1)/(1,N) slice (no lane<->sublane relayout of the edge features) and
        # results are accumulated LOCALLY -> a single lane-dense store per step below.
        node_rows = []
        for b in range(B):
            h_row = h_val[b:b + 1, :]                                       # (1, N)
            e_col = edgeT[:, b:b + 1]                                       # (E, 1)
            p_col = priT[:, b:b + 1]                                        # (E, 1)
            pairT = lrelu(a0 * h_row + a1 * e_col)                          # (E, N)
            timeT = lrelu(a2_0 * e_col + p_col)                             # (E, 1)
            scoreT = lrelu(a3_0 * timeT + a3_1 * pairT)                     # (E, N)
            att = jnp.where(inc_pos, scoreT, jnp.float32(NEG_BIG))          # (E, N)
            att = att - jnp.max(att, axis=1, keepdims=True)                 # softmax over nodes
            p = jnp.exp(att)
            attn = p / jnp.sum(p, axis=1, keepdims=True)                    # exact divide
            node_rows.append(jnp.sum(attn * e_col, axis=0, keepdims=True))  # (1, N)
        xs_hat = jnp.concatenate(node_rows, axis=0)                         # (B, N) local value

        # Single store per step, from the local accumulator (raw imputation output).
        out_ref[pl.ds(src, 1)] = xs_hat[None]

        # Fused epilogue: blend with observed values + fresh training-mode BatchNorm1d(N).
        step_f = (t + 1).astype(jnp.float32)
        miss = jnp.where(m_t > 0, 0.0, 1.0)
        xs_mix = (x_t + step_f) * m_t + (xs_hat + step_f) * miss
        mu = jnp.mean(xs_mix, axis=0, keepdims=True)                        # stats over batch
        var = jnp.mean((xs_mix - mu) ** 2, axis=0, keepdims=True)
        xs_bn = (xs_mix - mu) * lax.rsqrt(var + BN_EPS)

        # Carry state for the following steps.
        h_hist[pl.ds(t, 1)] = xs_bn[None]
        e_hist[pl.ds(t, 1)] = edgeT[None]
        mean_sc[...] = jnp.sum(jnp.sum(xs_hat, axis=1, keepdims=True),
                               axis=0, keepdims=True) * (1.0 / float(B * N))


def bithgat_directions_pallas(x_sbn, m_sbn, incidence, params):
    """Runs both THGATImputer directions in one pallas_call.

    x_sbn / m_sbn: (S, B, N) f32; incidence: (N, E) f32.
    Returns (fwd, bwd) raw imputations, each (S, B, N), both in original time order.
    """
    S, B, N = x_sbn.shape
    E = incidence.shape[1]

    incT = jnp.transpose(incidence)                               # (E, N)
    inv_deg = (1.0 / jnp.sum(incidence, axis=0))[:, None]         # (E, 1) exact divide

    kernel = functools.partial(_bithgat_kernel, S, B, N, E)

    # Resident-operand + scratch footprint (bytes).  Only override the scoped VMEM default
    # when the resident state would not fit it (keeps v7x's 64 MiB physical limit in mind).
    resident_bytes = 4 * (3 * S * B * N + 2 * E * N + E + N
                          + S * E * E + S * E * B + 2)
    cp_kwargs = {}
    if 2 * resident_bytes > (32 << 20):
        cp_kwargs["vmem_limit_bytes"] = int(min(2 * resident_bytes + (8 << 20), 60 << 20))

    out = pl.pallas_call(
        kernel,
        out_shape=jax.ShapeDtypeStruct((2, S, B, N), jnp.float32),
        grid=(2,),                                                 # 0: forward, 1: backward
        in_specs=[
            pl.BlockSpec((S, B, N), lambda d: (0, 0, 0)),          # x        (resident, shared)
            pl.BlockSpec((S, B, N), lambda d: (0, 0, 0)),          # mask     (resident, shared)
            pl.BlockSpec((E, N), lambda d: (0, 0)),                # incidence^T (resident)
            pl.BlockSpec((E, 1), lambda d: (0, 0)),                # exact 1/deg (resident)
            pl.BlockSpec((None, 1, N), lambda d: (d, 0, 0)),       # per-direction bias
            pl.BlockSpec((None, S, E, E), lambda d: (d, 0, 0, 0)), # per-direction weight2^T
            pl.BlockSpec(memory_space=pltpu.MemorySpace.SMEM),     # coef (2S, 8)
            pl.BlockSpec(memory_space=pltpu.MemorySpace.SMEM),     # wpad (2S, S)
            pl.BlockSpec(memory_space=pltpu.MemorySpace.SMEM),     # a2w  (2S, S)
        ],
        out_specs=pl.BlockSpec((None, S, B, N), lambda d: (d, 0, 0, 0)),
        scratch_shapes=[
            pltpu.VMEM((S, B, N), jnp.float32),   # BN-normalised node history
            pltpu.VMEM((S, E, B), jnp.float32),   # edge history (edge-major)
            pltpu.VMEM((1, 1), jnp.float32),      # mean of previous raw imputation
        ],
        # The two directions are independent -> "parallel" puts them on the two
        # TensorCores on v7x; on v5e/v6e they simply run back-to-back in one launch.
        compiler_params=pltpu.CompilerParams(
            dimension_semantics=("parallel",), **cp_kwargs),
    )(x_sbn, m_sbn, incT, inv_deg,
      params["bias"], params["w2T"], params["coef"], params["wpad"], params["a2w"])
    return out[0], out[1]


# ---------------------------------------------------------------------------
# BiTHGATImputer forward: fwd + time-reversed bwd direction, 'mlp' merge.
# ---------------------------------------------------------------------------
def bithgat_forward(x, incidence, mask, params):
    B, C, N, S = x.shape                                               # C == input_size == 1
    x_sbn = jnp.transpose(x[:, 0], (2, 0, 1)).astype(jnp.float32)      # (S, B, N)
    m_sbn = jnp.transpose(mask[:, 0], (2, 0, 1)).astype(jnp.float32)   # (S, B, N)
    inc = incidence.astype(jnp.float32)                                # (N, E)

    fwd, bwd = bithgat_directions_pallas(x_sbn, m_sbn, inc, params)

    # 1x1 Conv2d(2 -> 1) merge == a scalar axpy; left to XLA (a separate Pallas program
    # would cost a launch plus a full HBM round trip of both (S,B,N) arrays).
    w = params["out_w"].astype(jnp.float32)
    b = params["out_b"].astype(jnp.float32)
    merged = w[0, 0, 0, 0] * fwd + w[0, 1, 0, 0] * bwd + b[0]          # (S, B, N)
    return jnp.transpose(merged, (1, 2, 0))[:, None, :, :]             # (B, 1, N, S)


# ---------------------------------------------------------------------------
# Deterministic parameter init (shapes follow the module; torch.rand -> uniform[0,1)),
# packed into arrays consumed by the fused kernel:
#   coef[t] = [a0, a1, a2_0, a3_0, a3_1, w_x, w_m, w_n]
#   wpad[t, j] = weight_t[1+j] for j < t      (node-history weights, zero-padded)
#   a2w[t, j]  = a2_t[1+j]     for j < t      (edge-history weights, zero-padded)
#   w2T[t]     = weight2_t^T
# Forward/backward direction tables are stacked so one pallas_call serves both.
# ---------------------------------------------------------------------------
def _init_direction(key, N, E, S):
    ks = jax.random.split(key, 1 + 5 * S)
    bias = jax.random.uniform(ks[0], (1, N), jnp.float32)
    coef, wpad, a2w, w2T = [], [], [], []
    idx = 1
    for t in range(S):
        Ft = t + 3                      # x_s rows (1 + t) + mask (1) + pri_n (1)
        Ka = 2 if t == 0 else t + 1     # cat((edge, pri_e_sliced)) feature dim
        weight = jax.random.uniform(ks[idx + 0], (Ft,), jnp.float32)
        w2 = jax.random.uniform(ks[idx + 1], (E, E), jnp.float32)
        a = jax.random.uniform(ks[idx + 2], (2,), jnp.float32)
        a2 = jax.random.uniform(ks[idx + 3], (Ka,), jnp.float32)
        a3 = jax.random.uniform(ks[idx + 4], (2,), jnp.float32)
        idx += 5
        coef.append(jnp.stack([a[0], a[1], a2[0], a3[0], a3[1],
                               weight[0], weight[t + 1], weight[t + 2]]))
        wrow = jnp.zeros((S,), jnp.float32)
        arow = jnp.zeros((S,), jnp.float32)
        if t > 0:
            wrow = wrow.at[:t].set(weight[1:1 + t])
            arow = arow.at[:t].set(a2[1:1 + t])
        wpad.append(wrow)
        a2w.append(arow)
        w2T.append(w2.T)
    return {"bias": bias, "coef": jnp.stack(coef), "wpad": jnp.stack(wpad),
            "a2w": jnp.stack(a2w), "w2T": jnp.stack(w2T)}


def init_params(key, N, E, S):
    kf, kb, km = jax.random.split(key, 3)
    kw, kbb = jax.random.split(km)
    fwd = _init_direction(kf, N, E, S)
    bwd = _init_direction(kb, N, E, S)
    bound = 2.0 ** -0.5                  # Conv2d default init bound, fan_in = 2
    return {
        "bias": jnp.stack([fwd["bias"], bwd["bias"]], axis=0),            # (2, 1, N)
        "w2T": jnp.stack([fwd["w2T"], bwd["w2T"]], axis=0),                # (2, S, E, E)
        "coef": jnp.concatenate([fwd["coef"], bwd["coef"]], axis=0),       # (2S, 8)
        "wpad": jnp.concatenate([fwd["wpad"], bwd["wpad"]], axis=0),       # (2S, S)
        "a2w": jnp.concatenate([fwd["a2w"], bwd["a2w"]], axis=0),          # (2S, S)
        "out_w": jax.random.uniform(kw, (1, 2, 1, 1), jnp.float32, -bound, bound),
        "out_b": jax.random.uniform(kbb, (1,), jnp.float32, -bound, bound),
    }


if __name__ == "__main__":
    B, C, N, E, S = 2, 1, 16, 8, 4       # hidden_size == N (required by the bias broadcast)
    key = jax.random.PRNGKey(0)
    kx, kmk, kp = jax.random.split(key, 3)

    x = jax.random.normal(kx, (B, C, N, S), jnp.float32)
    mask = (jax.random.uniform(kmk, (B, C, N, S)) > 0.25).astype(jnp.float32)
    x = x * mask                          # missing values encoded as exact zeros

    # deterministic incidence (N, E): each node in 2 hyper-edges, every edge has degree 4
    rows = jnp.arange(N)
    incidence = jnp.zeros((N, E), jnp.float32)
    incidence = incidence.at[rows, rows % E].set(1.0)
    incidence = incidence.at[rows, (rows + 1) % E].set(1.0)

    params = init_params(kp, N, E, S)

    fwd_fn = jax.jit(lambda x_, inc_, m_: bithgat_forward(x_, inc_, m_, params))
    out = jax.block_until_ready(fwd_fn(x, incidence, mask))

    assert out.shape == (B, 1, N, S), out.shape
    assert out.dtype == jnp.float32
    assert not bool(jnp.isnan(out).any())
    print("KERNEL_OK")
</pallas_src>

<mosaic_0001>
module attributes {stable_mosaic.version = 11 : i64} {
  func.func @_bithgat_kernel(%arg0: i32, %arg1: memref<4x2x16xf32, #tpu.memory_space<vmem>>, %arg2: memref<4x2x16xf32, #tpu.memory_space<vmem>>, %arg3: memref<8x16xf32, #tpu.memory_space<vmem>>, %arg4: memref<8x1xf32, #tpu.memory_space<vmem>>, %arg5: memref<1x1x16xf32, #tpu.memory_space<vmem>>, %arg6: memref<1x4x8x8xf32, #tpu.memory_space<vmem>>, %arg7: memref<8x8xf32, #tpu.memory_space<smem>>, %arg8: memref<8x4xf32, #tpu.memory_space<smem>>, %arg9: memref<8x4xf32, #tpu.memory_space<smem>>, %arg10: memref<1x4x2x16xf32, #tpu.memory_space<vmem>>, %arg11: memref<4x2x16xf32, #tpu.memory_space<vmem>>, %arg12: memref<4x8x2xf32, #tpu.memory_space<vmem>>, %arg13: memref<1x1xf32, #tpu.memory_space<vmem>>) attributes {dimension_semantics = [#tpu.dimension_semantics<parallel>], iteration_bounds = array<i64: 2>, scalar_prefetch = 0 : i64, scratch_operands = 3 : i64, tpu.core_type = #tpu.core_type<tc>, window_params = [{pipeline_mode = #tpu.pipeline_mode<synchronous>, transform_indices = @transform_0, window_bounds = array<i64: 4, 2, 16>}, {pipeline_mode = #tpu.pipeline_mode<synchronous>, transform_indices = @transform_1, window_bounds = array<i64: 4, 2, 16>}, {pipeline_mode = #tpu.pipeline_mode<synchronous>, transform_indices = @transform_2, window_bounds = array<i64: 8, 16>}, {pipeline_mode = #tpu.pipeline_mode<synchronous>, transform_indices = @transform_3, window_bounds = array<i64: 8, 1>}, {transform_indices = @transform_4, window_bounds = array<i64: 1, 1, 16>}, {transform_indices = @transform_5, window_bounds = array<i64: 1, 4, 8, 8>}, {transform_indices = @transform_6, window_bounds = array<i64: 8, 8>}, {transform_indices = @transform_7, window_bounds = array<i64: 8, 4>}, {transform_indices = @transform_8, window_bounds = array<i64: 8, 4>}, {transform_indices = @transform_9, window_bounds = array<i64: 1, 4, 2, 16>}]} {
    %cst = arith.constant 0.000000e+00 : f32
    %0 = vector.broadcast %cst : f32 to vector<4x2x16xf32>
    %c0 = arith.constant 0 : index
    %c0_0 = arith.constant 0 : index
    %c0_1 = arith.constant 0 : index
    %1 = vector.load %arg11[%c0, %c0_0, %c0_1] : memref<4x2x16xf32, #tpu.memory_space<vmem>>, vector<4x2x16xf32>
    tpu.vector_store %arg11[%c0, %c0_0, %c0_1], %0 {strides = array<i32>} : memref<4x2x16xf32, #tpu.memory_space<vmem>>, vector<4x2x16xf32>,
    %cst_2 = arith.constant 0.000000e+00 : f32
    %2 = vector.broadcast %cst_2 : f32 to vector<4x8x2xf32>
    %c0_3 = arith.constant 0 : index
    %c0_4 = arith.constant 0 : index
    %c0_5 = arith.constant 0 : index
    %3 = vector.load %arg12[%c0_3, %c0_4, %c0_5] : memref<4x8x2xf32, #tpu.memory_space<vmem>>, vector<4x8x2xf32>
    tpu.vector_store %arg12[%c0_3, %c0_4, %c0_5], %2 {strides = array<i32>} : memref<4x8x2xf32, #tpu.memory_space<vmem>>, vector<4x8x2xf32>,
    %cst_6 = arith.constant 0.000000e+00 : f32
    %4 = vector.broadcast %cst_6 : f32 to vector<1x1xf32>
    %c0_7 = arith.constant 0 : index
    %c0_8 = arith.constant 0 : index
    %5 = vector.load %arg13[%c0_7, %c0_8] : memref<1x1xf32, #tpu.memory_space<vmem>>, vector<1x1xf32>
    tpu.vector_store %arg13[%c0_7, %c0_8], %4 {strides = array<i32>} : memref<1x1xf32, #tpu.memory_space<vmem>>, vector<1x1xf32>,
    %c0_9 = arith.constant 0 : index
    %c0_10 = arith.constant 0 : index
    %6 = vector.load %arg3[%c0_9, %c0_10] : memref<8x16xf32, #tpu.memory_space<vmem>>, vector<8x16xf32>
    %cst_11 = arith.constant 0.000000e+00 : f32
    %7 = vector.broadcast %cst_11 : f32 to vector<8x16xf32>
    %8 = arith.cmpf ogt, %6, %7 : vector<8x16xf32>
    %c0_12 = arith.constant 0 : index
    %c0_13 = arith.constant 0 : index
    %9 = vector.load %arg4[%c0_12, %c0_13] : memref<8x1xf32, #tpu.memory_space<vmem>>, vector<8x1xf32>
    %c0_14 = arith.constant 0 : index
    %c0_15 = arith.constant 0 : index
    %c0_16 = arith.constant 0 : index
    %10 = vector.load %arg5[%c0_14, %c0_15, %c0_16] : memref<1x1x16xf32, #tpu.memory_space<vmem>>, vector<1x1x16xf32>
    %11 = vector.shape_cast %10 : vector<1x1x16xf32> to vector<1x16xf32>
    %c0_i32 = arith.constant 0 : i32
    %c4_i32 = arith.constant 4 : i32
    %12 = arith.addi %c0_i32, %c4_i32 : i32
    %c1_i32 = arith.constant 1 : i32
    scf.for %arg14 = %c0_i32 to %12 step %c1_i32  : i32 {
      %c1_i32_18 = arith.constant 1 : i32
      %13 = arith.muli %arg14, %c1_i32_18 : i32
      %c0_i32_19 = arith.constant 0 : i32
      %14 = arith.addi %c0_i32_19, %13 : i32
      %c0_i32_20 = arith.constant 0 : i32
      %15 = arith.cmpi eq, %arg0, %c0_i32_20 : i32
      %c3_i32 = arith.constant 3 : i32
      %16 = arith.subi %c3_i32, %14 : i32
      %17 = arith.select %15, %14, %16 : i32
      %c4_i32_21 = arith.constant 4 : i32
      %18 = arith.muli %arg0, %c4_i32_21 : i32
      %19 = arith.addi %18, %14 : i32
      %20 = arith.index_cast %19 : i32 to index
      %c0_22 = arith.constant 0 : index
      %21 = memref.load %arg7[%20, %c0_22] : memref<8x8xf32, #tpu.memory_space<smem>>
      %22 = arith.index_cast %19 : i32 to index
      %c1 = arith.constant 1 : index
      %23 = memref.load %arg7[%22, %c1] : memref<8x8xf32, #tpu.memory_space<smem>>
      %24 = arith.index_cast %19 : i32 to index
      %c2 = arith.constant 2 : index
      %25 = memref.load %arg7[%24, %c2] : memref<8x8xf32, #tpu.memory_space<smem>>
      %26 = arith.index_cast %19 : i32 to index
      %c3 = arith.constant 3 : index
      %27 = memref.load %arg7[%26, %c3] : memref<8x8xf32, #tpu.memory_space<smem>>
      %28 = arith.index_cast %19 : i32 to index
      %c4 = arith.constant 4 : index
      %29 = memref.load %arg7[%28, %c4] : memref<8x8xf32, #tpu.memory_space<smem>>
      %30 = arith.index_cast %19 : i32 to index
      %c5 = arith.constant 5 : index
      %31 = memref.load %arg7[%30, %c5] : memref<8x8xf32, #tpu.memory_space<smem>>
      %32 = arith.index_cast %19 : i32 to index
      %c6 = arith.constant 6 : index
      %33 = memref.load %arg7[%32, %c6] : memref<8x8xf32, #tpu.memory_space<smem>>
      %34 = arith.index_cast %19 : i32 to index
      %c7 = arith.constant 7 : index
      %35 = memref.load %arg7[%34, %c7] : memref<8x8xf32, #tpu.memory_space<smem>>
      %36 = arith.index_cast %17 : i32 to index
      %c0_23 = arith.constant 0 : index
      %c0_24 = arith.constant 0 : index
      %37 = vector.load %arg1[%36, %c0_23, %c0_24] : memref<4x2x16xf32, #tpu.memory_space<vmem>>, vector<1x2x16xf32>
      %38 = vector.shape_cast %37 : vector<1x2x16xf32> to vector<2x16xf32>
      %39 = arith.index_cast %17 : i32 to index
      %c0_25 = arith.constant 0 : index
      %c0_26 = arith.constant 0 : index
      %40 = vector.load %arg2[%39, %c0_25, %c0_26] : memref<4x2x16xf32, #tpu.memory_space<vmem>>, vector<1x2x16xf32>
      %41 = vector.shape_cast %40 : vector<1x2x16xf32> to vector<2x16xf32>
      %c0_i32_27 = arith.constant 0 : i32
      %42 = arith.cmpi sgt, %14, %c0_i32_27 : i32
      %43 = arith.extui %42 : i1 to i32
      %44 = arith.sitofp %43 : i32 to f32
      %cst_28 = arith.constant 0.000000e+00 : f32
      %45 = vector.broadcast %cst_28 : f32 to vector<2x16xf32>
      %46 = arith.cmpf oeq, %38, %45 : vector<2x16xf32>
      %c0_29 = arith.constant 0 : index
      %c0_30 = arith.constant 0 : index
      %47 = vector.load %arg13[%c0_29, %c0_30] : memref<1x1xf32, #tpu.memory_space<vmem>>, vector<1x1xf32>
      %48 = vector.shape_cast %47 : vector<1x1xf32> to vector<1x1xf32>
      %49 = vector.broadcast %48 : vector<1x1xf32> to vector<2x16xf32>
      %50 = arith.select %46, %49, %38 : vector<2x16xi1>, vector<2x16xf32>
      %51 = vector.broadcast %44 : f32 to vector<2x16xf32>
      %52 = arith.mulf %51, %50 : vector<2x16xf32>
      %53 = vector.broadcast %31 : f32 to vector<2x16xf32>
      %54 = arith.mulf %53, %38 : vector<2x16xf32>
      %55 = vector.broadcast %33 : f32 to vector<2x16xf32>
      %56 = arith.mulf %55, %41 : vector<2x16xf32>
      %57 = arith.addf %54, %56 : vector<2x16xf32>
      %58 = vector.broadcast %35 : f32 to vector<2x16xf32>
      %59 = arith.mulf %58, %52 : vector<2x16xf32>
      %60 = arith.addf %57, %59 : vector<2x16xf32>
      %61 = vector.broadcast %11 : vector<1x16xf32> to vector<2x16xf32>
      %62 = arith.addf %60, %61 : vector<2x16xf32>
      %cst_31 = arith.constant 0.000000e+00 : f32
      %63 = vector.broadcast %cst_31 : f32 to vector<8x2xf32>
      %c0_i32_32 = arith.constant 0 : i32
      %64 = arith.subi %14, %c0_i32_32 : i32
      %65 = arith.addi %c0_i32_32, %64 : i32
      %c1_i32_33 = arith.constant 1 : i32
      %66:2 = scf.for %arg15 = %c0_i32_32 to %65 step %c1_i32_33 iter_args(%arg16 = %62, %arg17 = %63) -> (vector<2x16xf32>, vector<8x2xf32>)  : i32 {
        %223 = arith.index_cast %19 : i32 to index
        %224 = arith.index_cast %arg15 : i32 to index
        %225 = memref.load %arg8[%223, %224] : memref<8x4xf32, #tpu.memory_space<smem>>
        %226 = arith.index_cast %arg15 : i32 to index
        %c0_80 = arith.constant 0 : index
        %c0_81 = arith.constant 0 : index
        %227 = vector.load %arg11[%226, %c0_80, %c0_81] : memref<4x2x16xf32, #tpu.memory_space<vmem>>, vector<1x2x16xf32>
        %228 = vector.shape_cast %227 : vector<1x2x16xf32> to vector<2x16xf32>
        %229 = vector.broadcast %225 : f32 to vector<2x16xf32>
        %230 = arith.mulf %229, %228 : vector<2x16xf32>
        %231 = arith.addf %arg16, %230 : vector<2x16xf32>
        %232 = arith.index_cast %19 : i32 to index
        %233 = arith.index_cast %arg15 : i32 to index
        %234 = memref.load %arg9[%232, %233] : memref<8x4xf32, #tpu.memory_space<smem>>
        %235 = arith.index_cast %arg15 : i32 to index
        %c0_82 = arith.constant 0 : index
        %c0_83 = arith.constant 0 : index
        %236 = vector.load %arg12[%235, %c0_82, %c0_83] : memref<4x8x2xf32, #tpu.memory_space<vmem>>, vector<1x8x2xf32>
        %237 = vector.shape_cast %236 : vector<1x8x2xf32> to vector<8x2xf32>
        %238 = vector.broadcast %234 : f32 to vector<8x2xf32>
        %239 = arith.mulf %238, %237 : vector<8x2xf32>
        %240 = arith.addf %arg17, %239 : vector<8x2xf32>
        scf.yield %231, %240 : vector<2x16xf32>, vector<8x2xf32>
      }
      "tpu.trace_start"() <{level = 10 : i32, message = "en,bn->eb"}> : () -> ()
      %cst_34 = arith.constant dense<0.000000e+00> : vector<8x2xf32>
      %67 = tpu.matmul %6, %66#0, %cst_34 {dimension_numbers = #tpu.dot_dimension_numbers<[1], [1], [0], [0], [0, 0, 1, 0], [], []>} : vector<8x16xf32>, vector<2x16xf32>, vector<8x2xf32> -> vector<8x2xf32>
      "tpu.trace_stop"() : () -> ()
      %68 = vector.broadcast %9 : vector<8x1xf32> to vector<8x2xf32>
      %69 = arith.mulf %67, %68 : vector<8x2xf32>
      %c0_35 = arith.constant 0 : index
      %70 = arith.index_cast %14 : i32 to index
      %c0_36 = arith.constant 0 : index
      %c0_37 = arith.constant 0 : index
      %71 = vector.load %arg6[%c0_35, %70, %c0_36, %c0_37] : memref<1x4x8x8xf32, #tpu.memory_space<vmem>>, vector<1x1x8x8xf32>
      %72 = vector.shape_cast %71 : vector<1x1x8x8xf32> to vector<8x8xf32>
      %cst_38 = arith.constant dense<0.000000e+00> : vector<8x2xf32>
      %73 = tpu.matmul %72, %69, %cst_38 {dimension_numbers = #tpu.dot_dimension_numbers<[1], [0], [0], [1], [0, 0, 1, 1], [], []>} : vector<8x8xf32>, vector<8x2xf32>, vector<8x2xf32> -> vector<8x2xf32>
      %74 = vector.extract_strided_slice %66#0 {offsets = [0, 0], sizes = [1, 16], strides = [1, 1]} : vector<2x16xf32> to vector<1x16xf32>
      %75 = vector.extract_strided_slice %73 {offsets = [0, 0], sizes = [8, 1], strides = [1, 1]} : vector<8x2xf32> to vector<8x1xf32>
      %76 = vector.extract_strided_slice %66#1 {offsets = [0, 0], sizes = [8, 1], strides = [1, 1]} : vector<8x2xf32> to vector<8x1xf32>
      %77 = vector.broadcast %21 : f32 to vector<1x16xf32>
      %78 = arith.mulf %77, %74 : vector<1x16xf32>
      %79 = vector.broadcast %23 : f32 to vector<8x1xf32>
      %80 = arith.mulf %79, %75 : vector<8x1xf32>
      %81 = vector.broadcast %78 : vector<1x16xf32> to vector<8x16xf32>
      %82 = vector.broadcast %80 : vector<8x1xf32> to vector<8x16xf32>
      %83 = arith.addf %81, %82 : vector<8x16xf32>
      %cst_39 = arith.constant 0.000000e+00 : f32
      %84 = vector.broadcast %cst_39 : f32 to vector<8x16xf32>
      %85 = arith.cmpf ogt, %83, %84 : vector<8x16xf32>
      %cst_40 = arith.constant 2.000000e-01 : f32
      %86 = vector.broadcast %cst_40 : f32 to vector<8x16xf32>
      %87 = arith.mulf %86, %83 : vector<8x16xf32>
      %88 = arith.select %85, %83, %87 : vector<8x16xi1>, vector<8x16xf32>
      %89 = vector.broadcast %25 : f32 to vector<8x1xf32>
      %90 = arith.mulf %89, %75 : vector<8x1xf32>
      %91 = arith.addf %90, %76 : vector<8x1xf32>
      %cst_41 = arith.constant 0.000000e+00 : f32
      %92 = vector.broadcast %cst_41 : f32 to vector<8x1xf32>
      %93 = arith.cmpf ogt, %91, %92 : vector<8x1xf32>
      %cst_42 = arith.constant 2.000000e-01 : f32
      %94 = vector.broadcast %cst_42 : f32 to vector<8x1xf32>
      %95 = arith.mulf %94, %91 : vector<8x1xf32>
      %96 = arith.select %93, %91, %95 : vector<8x1xi1>, vector<8x1xf32>
      %97 = vector.broadcast %27 : f32 to vector<8x1xf32>
      %98 = arith.mulf %97, %96 : vector<8x1xf32>
      %99 = vector.broadcast %29 : f32 to vector<8x16xf32>
      %100 = arith.mulf %99, %88 : vector<8x16xf32>
      %101 = vector.broadcast %98 : vector<8x1xf32> to vector<8x16xf32>
      %102 = arith.addf %101, %100 : vector<8x16xf32>
      %cst_43 = arith.constant 0.000000e+00 : f32
      %103 = vector.broadcast %cst_43 : f32 to vector<8x16xf32>
      %104 = arith.cmpf ogt, %102, %103 : vector<8x16xf32>
      %cst_44 = arith.constant 2.000000e-01 : f32
      %105 = vector.broadcast %cst_44 : f32 to vector<8x16xf32>
      %106 = arith.mulf %105, %102 : vector<8x16xf32>
      %107 = arith.select %104, %102, %106 : vector<8x16xi1>, vector<8x16xf32>
      %cst_45 = arith.constant -9.000000e+15 : f32
      %108 = vector.broadcast %cst_45 : f32 to vector<8x16xf32>
      %109 = arith.select %8, %107, %108 : vector<8x16xi1>, vector<8x16xf32>
      %cst_46 = arith.constant dense<0xFF800000> : vector<8xf32>
      %110 = vector.multi_reduction <maximumf>, %109, %cst_46 [1] : vector<8x16xf32> to vector<8xf32>
      %111 = vector.shape_cast %110 : vector<8xf32> to vector<8x1xf32>
      %112 = vector.broadcast %111 : vector<8x1xf32> to vector<8x16xf32>
      %113 = arith.subf %109, %112 : vector<8x16xf32>
      %114 = math.exp %113 : vector<8x16xf32>
      %cst_47 = arith.constant dense<0.000000e+00> : vector<8xf32>
      %115 = vector.multi_reduction <add>, %114, %cst_47 [1] : vector<8x16xf32> to vector<8xf32>
      %116 = vector.shape_cast %115 : vector<8xf32> to vector<8x1xf32>
      %117 = vector.broadcast %116 : vector<8x1xf32> to vector<8x16xf32>
      %118 = arith.divf %114, %117 : vector<8x16xf32>
      %119 = vector.broadcast %75 : vector<8x1xf32> to vector<8x16xf32>
      %120 = arith.mulf %118, %119 : vector<8x16xf32>
      %cst_48 = arith.constant dense<0.000000e+00> : vector<16xf32>
      %121 = vector.multi_reduction <add>, %120, %cst_48 [0] : vector<8x16xf32> to vector<16xf32>
      %122 = vector.shape_cast %121 : vector<16xf32> to vector<1x16xf32>
      %123 = vector.extract_strided_slice %66#0 {offsets = [1, 0], sizes = [1, 16], strides = [1, 1]} : vector<2x16xf32> to vector<1x16xf32>
      %124 = vector.extract_strided_slice %73 {offsets = [0, 1], sizes = [8, 1], strides = [1, 1]} : vector<8x2xf32> to vector<8x1xf32>
      %125 = vector.extract_strided_slice %66#1 {offsets = [0, 1], sizes = [8, 1], strides = [1, 1]} : vector<8x2xf32> to vector<8x1xf32>
      %126 = vector.broadcast %21 : f32 to vector<1x16xf32>
      %127 = arith.mulf %126, %123 : vector<1x16xf32>
      %128 = vector.broadcast %23 : f32 to vector<8x1xf32>
      %129 = arith.mulf %128, %124 : vector<8x1xf32>
      %130 = vector.broadcast %127 : vector<1x16xf32> to vector<8x16xf32>
      %131 = vector.broadcast %129 : vector<8x1xf32> to vector<8x16xf32>
      %132 = arith.addf %130, %131 : vector<8x16xf32>
      %cst_49 = arith.constant 0.000000e+00 : f32
      %133 = vector.broadcast %cst_49 : f32 to vector<8x16xf32>
      %134 = arith.cmpf ogt, %132, %133 : vector<8x16xf32>
      %cst_50 = arith.constant 2.000000e-01 : f32
      %135 = vector.broadcast %cst_50 : f32 to vector<8x16xf32>
      %136 = arith.mulf %135, %132 : vector<8x16xf32>
      %137 = arith.select %134, %132, %136 : vector<8x16xi1>, vector<8x16xf32>
      %138 = vector.broadcast %25 : f32 to vector<8x1xf32>
      %139 = arith.mulf %138, %124 : vector<8x1xf32>
      %140 = arith.addf %139, %125 : vector<8x1xf32>
      %cst_51 = arith.constant 0.000000e+00 : f32
      %141 = vector.broadcast %cst_51 : f32 to vector<8x1xf32>
      %142 = arith.cmpf ogt, %140, %141 : vector<8x1xf32>
      %cst_52 = arith.constant 2.000000e-01 : f32
      %143 = vector.broadcast %cst_52 : f32 to vector<8x1xf32>
      %144 = arith.mulf %143, %140 : vector<8x1xf32>
      %145 = arith.select %142, %140, %144 : vector<8x1xi1>, vector<8x1xf32>
      %146 = vector.broadcast %27 : f32 to vector<8x1xf32>
      %147 = arith.mulf %146, %145 : vector<8x1xf32>
      %148 = vector.broadcast %29 : f32 to vector<8x16xf32>
      %149 = arith.mulf %148, %137 : vector<8x16xf32>
      %150 = vector.broadcast %147 : vector<8x1xf32> to vector<8x16xf32>
      %151 = arith.addf %150, %149 : vector<8x16xf32>
      %cst_53 = arith.constant 0.000000e+00 : f32
      %152 = vector.broadcast %cst_53 : f32 to vector<8x16xf32>
      %153 = arith.cmpf ogt, %151, %152 : vector<8x16xf32>
      %cst_54 = arith.constant 2.000000e-01 : f32
      %154 = vector.broadcast %cst_54 : f32 to vector<8x16xf32>
      %155 = arith.mulf %154, %151 : vector<8x16xf32>
      %156 = arith.select %153, %151, %155 : vector<8x16xi1>, vector<8x16xf32>
      %cst_55 = arith.constant -9.000000e+15 : f32
      %157 = vector.broadcast %cst_55 : f32 to vector<8x16xf32>
      %158 = arith.select %8, %156, %157 : vector<8x16xi1>, vector<8x16xf32>
      %cst_56 = arith.constant dense<0xFF800000> : vector<8xf32>
      %159 = vector.multi_reduction <maximumf>, %158, %cst_56 [1] : vector<8x16xf32> to vector<8xf32>
      %160 = vector.shape_cast %159 : vector<8xf32> to vector<8x1xf32>
      %161 = vector.broadcast %160 : vector<8x1xf32> to vector<8x16xf32>
      %162 = arith.subf %158, %161 : vector<8x16xf32>
      %163 = math.exp %162 : vector<8x16xf32>
      %cst_57 = arith.constant dense<0.000000e+00> : vector<8xf32>
      %164 = vector.multi_reduction <add>, %163, %cst_57 [1] : vector<8x16xf32> to vector<8xf32>
      %165 = vector.shape_cast %164 : vector<8xf32> to vector<8x1xf32>
      %166 = vector.broadcast %165 : vector<8x1xf32> to vector<8x16xf32>
      %167 = arith.divf %163, %166 : vector<8x16xf32>
      %168 = vector.broadcast %124 : vector<8x1xf32> to vector<8x16xf32>
      %169 = arith.mulf %167, %168 : vector<8x16xf32>
      %cst_58 = arith.constant dense<0.000000e+00> : vector<16xf32>
      %170 = vector.multi_reduction <add>, %169, %cst_58 [0] : vector<8x16xf32> to vector<16xf32>
      %171 = vector.shape_cast %170 : vector<16xf32> to vector<1x16xf32>
      %172 = tpu.concatenate %122, %171 in 0 : vector<1x16xf32>, vector<1x16xf32> -> vector<2x16xf32>
      %173 = vector.shape_cast %172 : vector<2x16xf32> to vector<1x2x16xf32>
      %c0_59 = arith.constant 0 : index
      %174 = arith.index_cast %17 : i32 to index
      %c0_60 = arith.constant 0 : index
      %c0_61 = arith.constant 0 : index
      %175 = vector.load %arg10[%c0_59, %174, %c0_60, %c0_61] : memref<1x4x2x16xf32, #tpu.memory_space<vmem>>, vector<1x1x2x16xf32>
      %176 = vector.shape_cast %175 : vector<1x1x2x16xf32> to vector<1x2x16xf32>
      %177 = vector.shape_cast %173 : vector<1x2x16xf32> to vector<1x1x2x16xf32>
      tpu.vector_store %arg10[%c0_59, %174, %c0_60, %c0_61], %177 {strides = array<i32>} : memref<1x4x2x16xf32, #tpu.memory_space<vmem>>, vector<1x1x2x16xf32>,
      %c1_i32_62 = arith.constant 1 : i32
      %178 = arith.addi %14, %c1_i32_62 : i32
      %179 = arith.sitofp %178 : i32 to f32
      %cst_63 = arith.constant 0.000000e+00 : f32
      %180 = vector.broadcast %cst_63 : f32 to vector<2x16xf32>
      %181 = arith.cmpf ogt, %41, %180 : vector<2x16xf32>
      %cst_64 = arith.constant 0.000000e+00 : f32
      %cst_65 = arith.constant 1.000000e+00 : f32
      %182 = vector.broadcast %cst_64 : f32 to vector<2x16xf32>
      %183 = vector.broadcast %cst_65 : f32 to vector<2x16xf32>
      %184 = arith.select %181, %182, %183 : vector<2x16xi1>, vector<2x16xf32>
      %185 = vector.broadcast %179 : f32 to vector<2x16xf32>
      %186 = arith.addf %38, %185 : vector<2x16xf32>
      %187 = arith.mulf %186, %41 : vector<2x16xf32>
      %188 = vector.broadcast %179 : f32 to vector<2x16xf32>
      %189 = arith.addf %172, %188 : vector<2x16xf32>
      %190 = arith.mulf %189, %184 : vector<2x16xf32>
      %191 = arith.addf %187, %190 : vector<2x16xf32>
      %cst_66 = arith.constant dense<0.000000e+00> : vector<16xf32>
      %192 = vector.multi_reduction <add>, %191, %cst_66 [0] : vector<2x16xf32> to vector<16xf32>
      %193 = vector.shape_cast %192 : vector<16xf32> to vector<1x16xf32>
      %cst_67 = arith.constant 2.000000e+00 : f32
      %194 = vector.broadcast %cst_67 : f32 to vector<1x16xf32>
      %195 = arith.divf %193, %194 : vector<1x16xf32>
      %196 = vector.broadcast %195 : vector<1x16xf32> to vector<2x16xf32>
      %197 = arith.subf %191, %196 : vector<2x16xf32>
      %198 = arith.mulf %197, %197 : vector<2x16xf32>
      %cst_68 = arith.constant dense<0.000000e+00> : vector<16xf32>
      %199 = vector.multi_reduction <add>, %198, %cst_68 [0] : vector<2x16xf32> to vector<16xf32>
      %200 = vector.shape_cast %199 : vector<16xf32> to vector<1x16xf32>
      %cst_69 = arith.constant 2.000000e+00 : f32
      %201 = vector.broadcast %cst_69 : f32 to vector<1x16xf32>
      %202 = arith.divf %200, %201 : vector<1x16xf32>
      %203 = vector.broadcast %195 : vector<1x16xf32> to vector<2x16xf32>
      %204 = arith.subf %191, %203 : vector<2x16xf32>
      %cst_70 = arith.constant 9.99999974E-6 : f32
      %205 = vector.broadcast %cst_70 : f32 to vector<1x16xf32>
      %206 = arith.addf %202, %205 : vector<1x16xf32>
      %207 = math.rsqrt %206 : vector<1x16xf32>
      %208 = vector.broadcast %207 : vector<1x16xf32> to vector<2x16xf32>
      %209 = arith.mulf %204, %208 : vector<2x16xf32>
      %210 = vector.shape_cast %209 : vector<2x16xf32> to vector<1x2x16xf32>
      %211 = arith.index_cast %14 : i32 to index
      %c0_71 = arith.constant 0 : index
      %c0_72 = arith.constant 0 : index
      %212 = vector.load %arg11[%211, %c0_71, %c0_72] : memref<4x2x16xf32, #tpu.memory_space<vmem>>, vector<1x2x16xf32>
      tpu.vector_store %arg11[%211, %c0_71, %c0_72], %210 {strides = array<i32>} : memref<4x2x16xf32, #tpu.memory_space<vmem>>, vector<1x2x16xf32>,
      %213 = vector.shape_cast %73 : vector<8x2xf32> to vector<1x8x2xf32>
      %214 = arith.index_cast %14 : i32 to index
      %c0_73 = arith.constant 0 : index
      %c0_74 = arith.constant 0 : index
      %215 = vector.load %arg12[%214, %c0_73, %c0_74] : memref<4x8x2xf32, #tpu.memory_space<vmem>>, vector<1x8x2xf32>
      tpu.vector_store %arg12[%214, %c0_73, %c0_74], %213 {strides = array<i32>} : memref<4x8x2xf32, #tpu.memory_space<vmem>>, vector<1x8x2xf32>,
      %cst_75 = arith.constant dense<0.000000e+00> : vector<2xf32>
      %216 = vector.multi_reduction <add>, %172, %cst_75 [1] : vector<2x16xf32> to vector<2xf32>
      %217 = vector.shape_cast %216 : vector<2xf32> to vector<2x1xf32>
      %cst_76 = arith.constant dense<0.000000e+00> : vector<1xf32>
      %218 = vector.multi_reduction <add>, %217, %cst_76 [0] : vector<2x1xf32> to vector<1xf32>
      %219 = vector.shape_cast %218 : vector<1xf32> to vector<1x1xf32>
      %cst_77 = arith.constant 3.125000e-02 : f32
      %220 = vector.broadcast %cst_77 : f32 to vector<1x1xf32>
      %221 = arith.mulf %219, %220 : vector<1x1xf32>
      %c0_78 = arith.constant 0 : index
      %c0_79 = arith.constant 0 : index
      %222 = vector.load %arg13[%c0_78, %c0_79] : memref<1x1xf32, #tpu.memory_space<vmem>>, vector<1x1xf32>
      tpu.vector_store %arg13[%c0_78, %c0_79], %221 {strides = array<i32>} : memref<1x1xf32, #tpu.memory_space<vmem>>, vector<1x1xf32>,
    }
    %c4_i32_17 = arith.constant 4 : i32
    return
  }
  func.func @transform_0(%arg0: i32) -> (i32, i32, i32) {
    %c0_i32 = arith.constant 0 : i32
    %c0_i32_0 = arith.constant 0 : i32
    %c0_i32_1 = arith.constant 0 : i32
    %c0_i32_2 = arith.constant 0 : i32
    return %c0_i32, %c0_i32_0, %c0_i32_1 : i32, i32, i32
  }
  func.func @transform_1(%arg0: i32) -> (i32, i32, i32) {
    %c0_i32 = arith.constant 0 : i32
    %c0_i32_0 = arith.constant 0 : i32
    %c0_i32_1 = arith.constant 0 : i32
    %c0_i32_2 = arith.constant 0 : i32
    return %c0_i32, %c0_i32_0, %c0_i32_1 : i32, i32, i32
  }
  func.func @transform_2(%arg0: i32) -> (i32, i32) {
    %c0_i32 = arith.constant 0 : i32
    %c0_i32_0 = arith.constant 0 : i32
    %c0_i32_1 = arith.constant 0 : i32
    return %c0_i32, %c0_i32_0 : i32, i32
  }
  func.func @transform_3(%arg0: i32) -> (i32, i32) {
    %c0_i32 = arith.constant 0 : i32
    %c0_i32_0 = arith.constant 0 : i32
    %c0_i32_1 = arith.constant 0 : i32
    return %c0_i32, %c0_i32_0 : i32, i32
  }
  func.func @transform_4(%arg0: i32) -> (i32, i32, i32) {
    %c0_i32 = arith.constant 0 : i32
    %c0_i32_0 = arith.constant 0 : i32
    %c0_i32_1 = arith.constant 0 : i32
    return %arg0, %c0_i32, %c0_i32_0 : i32, i32, i32
  }
  func.func @transform_5(%arg0: i32) -> (i32, i32, i32, i32) {
    %c0_i32 = arith.constant 0 : i32
    %c0_i32_0 = arith.constant 0 : i32
    %c0_i32_1 = arith.constant 0 : i32
    %c0_i32_2 = arith.constant 0 : i32
    return %arg0, %c0_i32, %c0_i32_0, %c0_i32_1 : i32, i32, i32, i32
  }
  func.func @transform_6(%arg0: i32) -> (i32, i32) {
    %c0_i32 = arith.constant 0 : i32
    %c0_i32_0 = arith.constant 0 : i32
    %c0_i32_1 = arith.constant 0 : i32
    return %c0_i32, %c0_i32_0 : i32, i32
  }
  func.func @transform_7(%arg0: i32) -> (i32, i32) {
    %c0_i32 = arith.constant 0 : i32
    %c0_i32_0 = arith.constant 0 : i32
    %c0_i32_1 = arith.constant 0 : i32
    return %c0_i32, %c0_i32_0 : i32, i32
  }
  func.func @transform_8(%arg0: i32) -> (i32, i32) {
    %c0_i32 = arith.constant 0 : i32
    %c0_i32_0 = arith.constant 0 : i32
    %c0_i32_1 = arith.constant 0 : i32
    return %c0_i32, %c0_i32_0 : i32, i32
  }
  func.func @transform_9(%arg0: i32) -> (i32, i32, i32, i32) {
    %c0_i32 = arith.constant 0 : i32
    %c0_i32_0 = arith.constant 0 : i32
    %c0_i32_1 = arith.constant 0 : i32
    %c0_i32_2 = arith.constant 0 : i32
    return %arg0, %c0_i32, %c0_i32_0, %c0_i32_1 : i32, i32, i32, i32
  }
}

</mosaic_0001>

<llo_original>
// kernel: _lambda_.1
$region0: #{_lambda_.1}
  #allocation0 [shape = 'u32[]', space=smem, size = 0x4, offset = 0x4, fixed_abs, tag = 'smem constant byte address 0x4 - core index']
  #allocation1 [shape = 'u32[144,128]{1,0:T(1,128)}', space=vmem, size = 0x12000, scoped, tag = 'internal scratch']
  #allocation2 [shape = 'f32[4,2,16]{2,1,0:T(2,128)}', space=vmem, size = 0x1000, scoped, tag = 'scratch operand']
  #allocation3 [shape = 'f32[4,8,2]{2,1,0:T(8,128)}', space=vmem, size = 0x4000, scoped, tag = 'scratch operand']
  #allocation4 [shape = 'f32[1,1]{1,0:T(1,128)}', space=vmem, size = 0x200, scoped, tag = 'scratch operand']
  %s0 = inlined_call_operand.vmem [shape: f32[4,2,16], index: 0, kind: input, shape index: {}]
  %s1 = inlined_call_operand.vmem [shape: f32[4,2,16], index: 1, kind: input, shape index: {}]
  %s2 = inlined_call_operand.vmem [shape: f32[8,16], index: 2, kind: input, shape index: {}]
  %s3 = inlined_call_operand.vmem [shape: f32[8,1], index: 3, kind: input, shape index: {}]
  %s4 = inlined_call_operand.hbm [shape: f32[2,1,16], index: 4, kind: input, shape index: {}]
  %s5 = inlined_call_operand.vmem [shape: f32[2,4,8,8], index: 5, kind: input, shape index: {}]
  %s6 = inlined_call_operand.hbm [shape: f32[8,8], index: 6, kind: input, shape index: {}]
  %s7 = inlined_call_operand.vmem [shape: f32[8,4], index: 7, kind: input, shape index: {}]
  %s8 = inlined_call_operand.vmem [shape: f32[8,4], index: 8, kind: input, shape index: {}]
  %s9 = inlined_call_operand.vmem [shape: f32[2,4,2,16], index: 9, kind: output, shape index: {}]
  %s10 = sld [smem:[#allocation0]]
  $region99: #{_lambda_.1} parent=0
    _
  %s12 = ssub.s32 1, %s10
  %s13 = scalar_select 0, %s12, %s10
  $region1: #{_lambda_.1} parent=0
    #allocation5 [shape = 'u8[1024]{0}', space=vmem, size = 0x400, scoped, tag = 'input window, operand 4']
    #allocation6 [shape = 's32[2]{0}', space=sflag, size = 0x8, scoped, tag = 'scoped memory for _lambda_.1']
    #allocation7 [shape = 's32[2]{0}', space=sflag, size = 0x8, scoped, tag = 'scoped memory for _lambda_.1']
    #allocation8 [shape = 's32[2]{0}', space=sflag, size = 0x8, scoped, tag = 'scoped memory for _lambda_.1']
    #allocation9 [shape = 'u8[4096]{0}', space=smem, size = 0x1000, scoped, tag = 'input window, operand 6, single buffered']
    #allocation10 [shape = 'u8[4096]{0}', space=smem, size = 0x1000, scoped, tag = 'input window, operand 7, single buffered']
    #allocation11 [shape = 'u8[4096]{0}', space=smem, size = 0x1000, scoped, tag = 'input window, operand 8, single buffered']
    #allocation12 [shape = 's32[1]{0}', space=sflag, size = 0x4, scoped, tag = 'scoped memory for _lambda_.1']
    %14 = vsyncpa [#allocation6], 0
    %s15 = scalar_lea.sflag [#allocation6], 1
    %16 = vsyncpa %s15, 0
    %17 = vsyncpa [#allocation7], 0
    %18 = vsyncpa [#allocation8], 0
    %19 = vsyncpa [#allocation12], 0
    loop: start=0, step=1, limit=4
    $region2: #{_lambda_.1} parent=1 // loop_pre_header
      _
    $region3: #{_lambda_.1} parent=1 // loop_header
      %s21 = sphi 0, %s25
      %p22 = scmp.ge.s32.totalorder %s21, 4
      %s29 = sphi 0, %s29
      %s31 = sphi 0, %s29
      %s32 = sphi 0, %s31
      %s46 = sphi 0, %s32
      %s50 = sphi 0, %s50
      %s52 = sphi 0, %s50
      %s53 = sphi 0, %s52
      %s67 = sphi 0, %s53
      %s71 = sphi 0, %s71
      %s73 = sphi 0, %s71
      %s74 = sphi 0, %s73
      %s88 = sphi 0, %s74
      %s92 = sphi 0, %s92
      %s94 = sphi 0, %s92
      %s95 = sphi 0, %s94
      %s109 = sphi 0, %s95
      %s115 = sphi 0, %s117
      %s118 = sphi 0, %s115
      %s119 = sphi 0, %s118
      %s135 = sphi 0, %s119
      %s141 = sphi 0, %s143
      %s144 = sphi 0, %s141
      %s145 = sphi 0, %s144
      %s161 = sphi 0, %s145
      %s165 = sphi 0, %s165
      %s167 = sphi 0, %s165
      %s168 = sphi 0, %s167
      %s182 = sphi 0, %s168
      %s186 = sphi 0, %s186
      %s188 = sphi 0, %s186
      %s189 = sphi 0, %s188
      %s203 = sphi 0, %s189
      %s207 = sphi 0, %s207
      %s209 = sphi 0, %s207
      %s210 = sphi 0, %s209
      %s224 = sphi 0, %s210
      %s230 = sphi 0, %s232
      %s233 = sphi 0, %s230
      %s234 = sphi 0, %s233
      %s250 = sphi 0, %s234
    $region4: #{_lambda_.1} parent=1 // loop_header_branch
      %24 = sbr.rel (%p22) target = $region8
    $region5: #{_lambda_.1} parent=1 // loop_body
      %s26 = ssub.s32 %s21, 1
      %s27 = ssub.s32 %s21, 2
      %s28 = sadd.s32 %s21, 1
      %s30 = sadd.s32 %s29, 1
      %p33 = scmp.eq.s32.totalorder %s21, 1
      %p34 = scmp.ne.s32.totalorder %s29, %s31
      %p35 = scmp.eq.s32.totalorder %s21, 0
      %p36 = por %p34, %p35
      %p37 = scmp.ne.s32.totalorder %s29, %s31
      %p38 = scmp.eq.s32.totalorder %s26, 1
      %p39 = por %p37, %p38
      %p40 = scmp.ne.s32.totalorder %s31, %s32
      %p41 = scmp.eq.s32.totalorder %s26, 0
      %p42 = por %p40, %p41
      %p43 = scmp.ne.s32.totalorder %s31, %s32
      %p44 = scmp.eq.s32.totalorder %s27, 1
      %p45 = por %p43, %p44
      %p47 = scmp.ne.s32.totalorder %s32, %s46
      %p48 = scmp.eq.s32.totalorder %s27, 0
      %p49 = por %p47, %p48
      %s51 = sadd.s32 %s50, 1
      %p54 = scmp.eq.s32.totalorder %s21, 1
      %p55 = scmp.ne.s32.totalorder %s50, %s52
      %p56 = scmp.eq.s32.totalorder %s21, 0
      %p57 = por %p55, %p56
      %p58 = scmp.ne.s32.totalorder %s50, %s52
      %p59 = scmp.eq.s32.totalorder %s26, 1
      %p60 = por %p58, %p59
      %p61 = scmp.ne.s32.totalorder %s52, %s53
      %p62 = scmp.eq.s32.totalorder %s26, 0
      %p63 = por %p61, %p62
      %p64 = scmp.ne.s32.totalorder %s52, %s53
      %p65 = scmp.eq.s32.totalorder %s27, 1
      %p66 = por %p64, %p65
      %p68 = scmp.ne.s32.totalorder %s53, %s67
      %p69 = scmp.eq.s32.totalorder %s27, 0
      %p70 = por %p68, %p69
      %s72 = sadd.s32 %s71, 1
      %p75 = scmp.eq.s32.totalorder %s21, 1
      %p76 = scmp.ne.s32.totalorder %s71, %s73
      %p77 = scmp.eq.s32.totalorder %s21, 0
      %p78 = por %p76, %p77
      %p79 = scmp.ne.s32.totalorder %s71, %s73
      %p80 = scmp.eq.s32.totalorder %s26, 1
      %p81 = por %p79, %p80
      %p82 = scmp.ne.s32.totalorder %s73, %s74
      %p83 = scmp.eq.s32.totalorder %s26, 0
      %p84 = por %p82, %p83
      %p85 = scmp.ne.s32.totalorder %s73, %s74
      %p86 = scmp.eq.s32.totalorder %s27, 1
      %p87 = por %p85, %p86
      %p89 = scmp.ne.s32.totalorder %s74, %s88
      %p90 = scmp.eq.s32.totalorder %s27, 0
      %p91 = por %p89, %p90
      %s93 = sadd.s32 %s92, 1
      %p96 = scmp.eq.s32.totalorder %s21, 1
      %p97 = scmp.ne.s32.totalorder %s92, %s94
      %p98 = scmp.eq.s32.totalorder %s21, 0
      %p99 = por %p97, %p98
      %p100 = scmp.ne.s32.totalorder %s92, %s94
      %p101 = scmp.eq.s32.totalorder %s26, 1
      %p102 = por %p100, %p101
      %p103 = scmp.ne.s32.totalorder %s94, %s95
      %p104 = scmp.eq.s32.totalorder %s26, 0
      %p105 = por %p103, %p104
      %p106 = scmp.ne.s32.totalorder %s94, %s95
      %p107 = scmp.eq.s32.totalorder %s27, 1
      %p108 = por %p106, %p107
      %p110 = scmp.ne.s32.totalorder %s95, %s109
      %p111 = scmp.eq.s32.totalorder %s27, 0
      %p112 = por %p110, %p111
      %s113 = ssub.s32 %s21, %s28
      %p114 = scmp.eq.s32.totalorder %s113, 0
      %s116 = sadd.s32 %s115, 1
      %s117 = scalar_select %p114, %s115, %s116
      %p120 = pneg %p114
      %p121 = scmp.eq.s32.totalorder %s21, 1
      %p122 = por %p120, %p121
      %p123 = scmp.ne.s32.totalorder %s115, %s118
      %p124 = scmp.eq.s32.totalorder %s21, 0
      %p125 = por %p123, %p124
      %p126 = scmp.ne.s32.totalorder %s115, %s118
      %p127 = scmp.eq.s32.totalorder %s26, 1
      %p128 = por %p126, %p127
      %p129 = scmp.ne.s32.totalorder %s118, %s119
      %p130 = scmp.eq.s32.totalorder %s26, 0
      %p131 = por %p129, %p130
      %p132 = scmp.ne.s32.totalorder %s118, %s119
      %p133 = scmp.eq.s32.totalorder %s27, 1
      %p134 = por %p132, %p133
      %p136 = scmp.ne.s32.totalorder %s119, %s135
      %p137 = scmp.eq.s32.totalorder %s27, 0
      %p138 = por %p136, %p137
      %s139 = ssub.s32 %s21, %s28
      %p140 = scmp.eq.s32.totalorder %s139, 0
      %s142 = sadd.s32 %s141, 1
      %s143 = scalar_select %p140, %s141, %s142
      %p146 = pneg %p140
      %p147 = scmp.eq.s32.totalorder %s21, 1
      %p148 = por %p146, %p147
      %p149 = scmp.ne.s32.totalorder %s141, %s144
      %p150 = scmp.eq.s32.totalorder %s21, 0
      %p151 = por %p149, %p150
      %p152 = scmp.ne.s32.totalorder %s141, %s144
      %p153 = scmp.eq.s32.totalorder %s26, 1
      %p154 = por %p152, %p153
      %p155 = scmp.ne.s32.totalorder %s144, %s145
      %p156 = scmp.eq.s32.totalorder %s26, 0
      %p157 = por %p155, %p156
      %p158 = scmp.ne.s32.totalorder %s144, %s145
      %p159 = scmp.eq.s32.totalorder %s27, 1
      %p160 = por %p158, %p159
      %p162 = scmp.ne.s32.totalorder %s145, %s161
      %p163 = scmp.eq.s32.totalorder %s27, 0
      %p164 = por %p162, %p163
      %s166 = sadd.s32 %s165, 1
      %p169 = scmp.eq.s32.totalorder %s21, 1
      %p170 = scmp.ne.s32.totalorder %s165, %s167
      %p171 = scmp.eq.s32.totalorder %s21, 0
      %p172 = por %p170, %p171
      %p173 = scmp.ne.s32.totalorder %s165, %s167
      %p174 = scmp.eq.s32.totalorder %s26, 1
      %p175 = por %p173, %p174
      %p176 = scmp.ne.s32.totalorder %s167, %s168
      %p177 = scmp.eq.s32.totalorder %s26, 0
      %p178 = por %p176, %p177
      %p179 = scmp.ne.s32.totalorder %s167, %s168
      %p180 = scmp.eq.s32.totalorder %s27, 1
      %p181 = por %p179, %p180
      %p183 = scmp.ne.s32.totalorder %s168, %s182
      %p184 = scmp.eq.s32.totalorder %s27, 0
      %p185 = por %p183, %p184
      %s187 = sadd.s32 %s186, 1
      %p190 = scmp.eq.s32.totalorder %s21, 1
      %p191 = scmp.ne.s32.totalorder %s186, %s188
      %p192 = scmp.eq.s32.totalorder %s21, 0
      %p193 = por %p191, %p192
      %p194 = scmp.ne.s32.totalorder %s186, %s188
      %p195 = scmp.eq.s32.totalorder %s26, 1
      %p196 = por %p194, %p195
      %p197 = scmp.ne.s32.totalorder %s188, %s189
      %p198 = scmp.eq.s32.totalorder %s26, 0
      %p199 = por %p197, %p198
      %p200 = scmp.ne.s32.totalorder %s188, %s189
      %p201 = scmp.eq.s32.totalorder %s27, 1
      %p202 = por %p200, %p201
      %p204 = scmp.ne.s32.totalorder %s189, %s203
      %p205 = scmp.eq.s32.totalorder %s27, 0
      %p206 = por %p204, %p205
      %s208 = sadd.s32 %s207, 1
      %p211 = scmp.eq.s32.totalorder %s21, 1
      %p212 = scmp.ne.s32.totalorder %s207, %s209
      %p213 = scmp.eq.s32.totalorder %s21, 0
      %p214 = por %p212, %p213
      %p215 = scmp.ne.s32.totalorder %s207, %s209
      %p216 = scmp.eq.s32.totalorder %s26, 1
      %p217 = por %p215, %p216
      %p218 = scmp.ne.s32.totalorder %s209, %s210
      %p219 = scmp.eq.s32.totalorder %s26, 0
      %p220 = por %p218, %p219
      %p221 = scmp.ne.s32.totalorder %s209, %s210
      %p222 = scmp.eq.s32.totalorder %s27, 1
      %p223 = por %p221, %p222
      %p225 = scmp.ne.s32.totalorder %s210, %s224
      %p226 = scmp.eq.s32.totalorder %s27, 0
      %p227 = por %p225, %p226
      %s228 = ssub.s32 %s21, %s28
      %p229 = scmp.eq.s32.totalorder %s228, 0
      %s231 = sadd.s32 %s230, 1
      %s232 = scalar_select %p229, %s230, %s231
      %p235 = pneg %p229
      %p236 = scmp.eq.s32.totalorder %s21, 1
      %p237 = por %p235, %p236
      %p238 = scmp.ne.s32.totalorder %s230, %s233
      %p239 = scmp.eq.s32.totalorder %s21, 0
      %p240 = por %p238, %p239
      %p241 = scmp.ne.s32.totalorder %s230, %s233
      %p242 = scmp.eq.s32.totalorder %s26, 1
      %p243 = por %p241, %p242
      %p244 = scmp.ne.s32.totalorder %s233, %s234
      %p245 = scmp.eq.s32.totalorder %s26, 0
      %p246 = por %p244, %p245
      %p247 = scmp.ne.s32.totalorder %s233, %s234
      %p248 = scmp.eq.s32.totalorder %s27, 1
      %p249 = por %p247, %p248
      %p251 = scmp.ne.s32.totalorder %s234, %s250
      %p252 = scmp.eq.s32.totalorder %s27, 0
      %p253 = por %p251, %p252
      %p254 = scmp.le.s32.totalorder 1, %s21
      %p255 = scmp.lt.s32.totalorder %s21, 3
      %p256 = pnand %p254, %p255
      %p257 = pneg %p256
      // Predicated region
      $region9: #{_lambda_.1} parent=5 // pred_check
        _
      $region10: #{_lambda_.1} parent=5 // pred_check_branch
        %259 = sbr.rel (%p256) target = $region12
      $region11: #{_lambda_.1} parent=5 // pred_region
        %s260 = ssub.s32 %s21, 1
        // Predicated region
        $region13: #{_lambda_.1} parent=11 // pred_check
          %p261 = pneg %p42
        $region14: #{_lambda_.1} parent=11 // pred_check_branch
          %263 = sbr.rel (%p261) target = $region16
        $region15: #{_lambda_.1} parent=11 // pred_region
          _
        $region16: #{_lambda_.1} parent=11 // pred_fallthru
          _
        // Predicated region
        $region17: #{_lambda_.1} parent=11 // pred_check
          %p264 = pneg %p63
        $region18: #{_lambda_.1} parent=11 // pred_check_branch
          %266 = sbr.rel (%p264) target = $region20
        $region19: #{_lambda_.1} parent=11 // pred_region
          _
        $region20: #{_lambda_.1} parent=11 // pred_fallthru
          _
        // Predicated region
        $region21: #{_lambda_.1} parent=11 // pred_check
          %p267 = pneg %p84
        $region22: #{_lambda_.1} parent=11 // pred_check_branch
          %269 = sbr.rel (%p267) target = $region24
        $region23: #{_lambda_.1} parent=11 // pred_region
          _
        $region24: #{_lambda_.1} parent=11 // pred_fallthru
          _
        // Predicated region
        $region25: #{_lambda_.1} parent=11 // pred_check
          %p270 = pneg %p105
        $region26: #{_lambda_.1} parent=11 // pred_check_branch
          %272 = sbr.rel (%p270) target = $region28
        $region27: #{_lambda_.1} parent=11 // pred_region
          _
        $region28: #{_lambda_.1} parent=11 // pred_fallthru
          _
        // Predicated region
        $region29: #{_lambda_.1} parent=11 // pred_check
          %p273 = pneg %p178
        $region30: #{_lambda_.1} parent=11 // pred_check_branch
          %275 = sbr.rel (%p273) target = $region32
        $region31: #{_lambda_.1} parent=11 // pred_region
          %s277 = ssub.s32 128, 128
          %278 = vsyncadd [#allocation7], %s277
          %281 = dma.hbm_to_smem %s6, 128, [#allocation9], [#allocation7]
        $region32: #{_lambda_.1} parent=11 // pred_fallthru
          _
        // Predicated region
        $region33: #{_lambda_.1} parent=11 // pred_check
          %p282 = pneg %p199
        $region34: #{_lambda_.1} parent=11 // pred_check_branch
          %284 = sbr.rel (%p282) target = $region36
        $region35: #{_lambda_.1} parent=11 // pred_region
          %s286 = ssub.s32 128, 128
          %287 = vsyncadd [#allocation8], %s286
          %s289 = sshll.u32 %s7, 4
          %s290 = int_to_ptr.vmem [resolvable:$true] %s289
          %292 = dma.vmem_to_smem %s290, 128, [#allocation10], [#allocation8]
        $region36: #{_lambda_.1} parent=11 // pred_fallthru
          _
        // Predicated region
        $region37: #{_lambda_.1} parent=11 // pred_check
          %p293 = pneg %p220
        $region38: #{_lambda_.1} parent=11 // pred_check_branch
          %295 = sbr.rel (%p293) target = $region40
        $region39: #{_lambda_.1} parent=11 // pred_region
          %s297 = ssub.s32 128, 128
          %298 = vsyncadd [#allocation12], %s297
          %s300 = sshll.u32 %s8, 4
          %s301 = int_to_ptr.vmem [resolvable:$true] %s300
          %303 = dma.vmem_to_smem %s301, 128, [#allocation11], [#allocation12]
        $region40: #{_lambda_.1} parent=11 // pred_fallthru
          _
      $region12: #{_lambda_.1} parent=5 // pred_fallthru
        _
      %p304 = scmp.lt.s32.totalorder %s21, 2
      // Predicated region
      $region41: #{_lambda_.1} parent=5 // pred_check
        %p305 = pneg %p304
      $region42: #{_lambda_.1} parent=5 // pred_check_branch
        %307 = sbr.rel (%p305) target = $region44
      $region43: #{_lambda_.1} parent=5 // pred_region
        // Predicated region
        $region45: #{_lambda_.1} parent=43 // pred_check
          %p308 = pneg %p125
        $region46: #{_lambda_.1} parent=43 // pred_check_branch
          %310 = sbr.rel (%p308) target = $region48
        $region47: #{_lambda_.1} parent=43 // pred_region
          %s311 = sand.u32 %s115, 1
          %s312 = scalar_lea.sflag [#allocation6], %s311
          %s313 = sand.u32 %s115, 1
          %s314 = scalar_lea.vmem [#allocation5], %s313
          %s316 = ssub.s32 16, 16
          %317 = vsyncadd %s312, %s316
          %s318 = smul.addr %s21, 16
          %s319 = scalar_lea.hbm %s4, %s318
          %s321 = sshll.u32 %s314, 4
          %s322 = int_to_ptr.vmem [resolvable:$true] %s321
          %324 = dma.hbm_to_vmem [thread:$0]  %s319, 16, %s322, %s312
        $region48: #{_lambda_.1} parent=43 // pred_fallthru
          _
        // Predicated region
        $region49: #{_lambda_.1} parent=43 // pred_check
          %p325 = pneg %p151
        $region50: #{_lambda_.1} parent=43 // pred_check_branch
          %327 = sbr.rel (%p325) target = $region52
        $region51: #{_lambda_.1} parent=43 // pred_region
          %p328 = scmp.lt.s32.totalorder %s21, 1
          %s329 = scalar_select %p328, %s21, 1
          %s330 = smul.addr %s329, 4
          %s331 = smul.addr %s330, 8
          %s332 = scalar_lea.vmem %s5, %s331
        $region52: #{_lambda_.1} parent=43 // pred_fallthru
          _
      $region44: #{_lambda_.1} parent=5 // pred_fallthru
        _
      %p333 = scmp.le.s32.totalorder 1, %s21
      %p334 = scmp.lt.s32.totalorder %s21, 3
      %p335 = pnand %p333, %p334
      %p336 = pneg %p335
      // Predicated region
      $region53: #{_lambda_.1} parent=5 // pred_check
        _
      $region54: #{_lambda_.1} parent=5 // pred_check_branch
        %338 = sbr.rel (%p335) target = $region56
      $region55: #{_lambda_.1} parent=5 // pred_region
        %s339 = ssub.s32 %s21, 1
        %s340 = sand.u32 %s118, 1
        %s341 = scalar_lea.sflag [#allocation6], %s340
        %s342 = sand.u32 %s118, 1
        %s343 = scalar_lea.vmem [#allocation5], %s342
        // Predicated region
        $region57: #{_lambda_.1} parent=55 // pred_check
          %p344 = pneg %p131
        $region58: #{_lambda_.1} parent=55 // pred_check_branch
          %346 = sbr.rel (%p344) target = $region60
        $region59: #{_lambda_.1} parent=55 // pred_region
          %347 = dma.done %s341, 16
        $region60: #{_lambda_.1} parent=55 // pred_fallthru
          _
        // Predicated region
        $region61: #{_lambda_.1} parent=55 // pred_check
          %p348 = pneg %p178
        $region62: #{_lambda_.1} parent=55 // pred_check_branch
          %350 = sbr.rel (%p348) target = $region64
        $region63: #{_lambda_.1} parent=55 // pred_region
          %351 = dma.done [#allocation7], 128
        $region64: #{_lambda_.1} parent=55 // pred_fallthru
          _
        // Predicated region
        $region65: #{_lambda_.1} parent=55 // pred_check
          %p352 = pneg %p199
        $region66: #{_lambda_.1} parent=55 // pred_check_branch
          %354 = sbr.rel (%p352) target = $region68
        $region67: #{_lambda_.1} parent=55 // pred_region
          %355 = dma.done [#allocation8], 128
        $region68: #{_lambda_.1} parent=55 // pred_fallthru
          _
        // Predicated region
        $region69: #{_lambda_.1} parent=55 // pred_check
          %p356 = pneg %p220
        $region70: #{_lambda_.1} parent=55 // pred_check_branch
          %358 = sbr.rel (%p356) target = $region72
        $region71: #{_lambda_.1} parent=55 // pred_region
          %359 = dma.done [#allocation12], 128
        $region72: #{_lambda_.1} parent=55 // pred_fallthru
          _
        %360 = sfence
        %p361 = pneg %p42
        %p362 = pneg %p39
        %p363 = pneg %p63
        %p364 = pneg %p60
        %p365 = pneg %p84
        %p366 = pneg %p81
        %p367 = pneg %p105
        %p368 = pneg %p102
        %s369 = sand.u32 %s118, 1
        %s370 = scalar_lea.sflag [#allocation6], %s369
        %s371 = sand.u32 %s118, 1
        %s372 = scalar_lea.vmem [#allocation5], %s371
        %p373 = pneg %p131
        %p374 = pneg %p128
        %p375 = scmp.lt.s32.totalorder %s26, 1
        %s376 = scalar_select %p375, %s26, 1
        %s377 = smul.addr %s376, 4
        %s378 = smul.addr %s377, 8
        %s379 = scalar_lea.vmem %s5, %s378
        %p380 = pneg %p157
        %p381 = pneg %p154
        %p382 = pneg %p178
        %p383 = pneg %p175
        %p384 = pneg %p199
        %p385 = pneg %p196
        %p386 = pneg %p220
        %p387 = pneg %p217
        %p388 = pneg %p246
        %p389 = pneg %p243
        %p390 = scmp.lt.s32.totalorder %s26, 1
        %s391 = scalar_select %p390, %s26, 1
        %s392 = smul.addr %s391, 4
        %s393 = smul.addr %s392, 2
        %s394 = scalar_lea.vmem %s9, %s393
        %p395 = scmp.lt.s32.totalorder %s26, 1
        %s396 = scalar_select %p395, %s26, 1
        %s397 = smul.addr %s396, 4
        %s398 = smul.addr %s397, 8
        %s399 = scalar_lea.vmem %s5, %s398
        %p400 = scmp.lt.s32.totalorder %s26, 1
        %s401 = scalar_select %p400, %s26, 1
        %s402 = smul.addr %s401, 4
        %s403 = smul.addr %s402, 2
        %s404 = scalar_lea.vmem %s9, %s403
        %vm405 = vcmask 123904
        %406 = vst.msk [vmem:[#allocation2] sm:$0x3] %vm405, 0.0
        %407 = vst.msk [vmem:[#allocation2 + $0x2] sm:$0x3] %vm405, 0.0
        %408 = vst.msk [vmem:[#allocation2 + $0x4] sm:$0x3] %vm405, 0.0
        %409 = vst.msk [vmem:[#allocation2 + $0x6] sm:$0x3] %vm405, 0.0
        %vm410 = vcmask 15360
        %411 = vst.msk [vmem:[#allocation3] sm:$0xff] %vm410, 0.0
        %412 = vst.msk [vmem:[#allocation3 + $0x8] sm:$0xff] %vm410, 0.0
        %413 = vst.msk [vmem:[#allocation3 + $0x10] sm:$0xff] %vm410, 0.0
        %414 = vst.msk [vmem:[#allocation3 + $0x18] sm:$0xff] %vm410, 0.0
        %vm415 = vcmask 0
        %416 = vst.msk [vmem:[#allocation4] sm:$0x1] %vm415, 0.0
        %v417 = vld [vmem:[%s2] sm:$0xff]
        %vm418 = vcmp.gt.f32.partialorder %v417, 0.0
        %v419 = vld [vmem:[%s3] sm:$0xff]
        %v420 = vld [vmem:[%s343] sm:$0x1]
        loop: start=0, step=1, limit=4
        $region73: #{_lambda_.1} parent=55 // loop_pre_header
          _
        $region74: #{_lambda_.1} parent=55 // loop_header
          %s422 = sphi 0, %s426
          %p423 = scmp.ge.s32.totalorder %s422, 4
        $region75: #{_lambda_.1} parent=55 // loop_header_branch
          %425 = sbr.rel (%p423) target = $region79
        $region76: #{_lambda_.1} parent=55 // loop_body
          %p427 = scmp.eq.s32.totalorder %s26, 0
          %s428 = ssub.s32 3, %s422
          %s429 = scalar_select %p427, %s422, %s428
          %s430 = smul.u32 %s26, 4
          %s431 = sadd.s32 %s430, %s422
          %s432 = smul.u32 %s431, 128
          %s433 = sld [smem:[#allocation9 + %s432]]
          %s434 = sadd.s32 %s432, 1
          %s435 = sld [smem:[#allocation9 + %s434]]
          %s436 = sadd.s32 %s432, 2
          %s437 = sld [smem:[#allocation9 + %s436]]
          %s438 = sadd.s32 %s432, 3
          %s439 = sld [smem:[#allocation9 + %s438]]
          %s440 = sadd.s32 %s432, 4
          %s441 = sld [smem:[#allocation9 + %s440]]
          %s442 = sadd.s32 %s432, 5
          %s443 = sld [smem:[#allocation9 + %s442]]
          %s444 = sadd.s32 %s432, 6
          %s445 = sld [smem:[#allocation9 + %s444]]
          %s446 = sadd.s32 %s432, 7
          %s447 = sld [smem:[#allocation9 + %s446]]
          %s448 = smul.u32 %s429, 2
          %s449 = scalar_lea.vmem %s0, %s448
          %v450 = vld [vmem:[%s449] sm:$0x3]
          %s451 = scalar_lea.vmem %s1, %s448
          %v452 = vld [vmem:[%s451] sm:$0x3]
          %p453 = scmp.gt.s32.totalorder %s422, 0
          %s454 = scalar_select %p453, 1, 0
          %s455 = scvt.s32.f32 %s454
          %vm456 = vcmp.eq.f32.partialorder %v450, 0.0
          %v457 = vld [vmem:[#allocation4] sm:$0x1]
          %v459 = vlaneseq
          %v460 = vshrl.u32 %v459, 7
          %v461 = vsub.s32 0, %v460
          %v462 = vrot.slane %v457, %v461
          %463 = vset.pattern.permute.xlu0 0
          %464 = vperm.xlu0 %463, %v462
          %v465 = vpop.permute.xlu0 %464
          %v467 = vsel %vm456, %v465, %v450
          %v468 = vstv %s455
          %v469 = vmul.f32 %v468, %v467
          %v470 = vstv %s443
          %v471 = vmul.f32 %v470, %v450
          %v472 = vstv %s445
          %v473 = vmul.f32 %v472, %v452
          %v474 = vadd.f32 %v471, %v473
          %v475 = vstv %s447
          %v476 = vmul.f32 %v475, %v469
          %v477 = vadd.f32 %v474, %v476
          %v479 = vlaneseq
          %v480 = vshrl.u32 %v479, 7
          %v481 = vsub.s32 0, %v480
          %v482 = vrot.slane %v420, %v481
          %v484 = vadd.f32 %v477, %v482
          // While loop
          $region80: #{_lambda_.1} parent=76 // loop_pre_header
            _
          $region81: #{_lambda_.1} parent=76 // loop_header
            %s486 = sphi 0, %s488
            %p487 = scmp.ge.s32.totalorder %s486, %s422
            %v491 = vphi %v484, %v506
            %v492 = vphi 0.0, %v513
          $region82: #{_lambda_.1} parent=76 // loop_header_branch
            %490 = sbr.rel (%p487) target = $region86
          $region83: #{_lambda_.1} parent=76 // loop_body
            %s493 = sshra.s32 %s486, 7
            %s494 = sand.u32 %s486, 127
            %s495 = sadd.s32 %s493, %s431
            %s496 = smul.u32 %s495, 128
            %s497 = sshra.s32 %s486, 7
            %s498 = sand.u32 %s486, 127
            %s499 = sadd.s32 %s496, %s498
            %s500 = sld [smem:[#allocation10 + %s499]]
            %s501 = smul.u32 %s486, 2
            %s502 = scalar_lea.vmem [#allocation2], %s501
            %v503 = vld [vmem:[%s502] sm:$0x3]
            %v504 = vstv %s500
            %v505 = vmul.f32 %v504, %v503
            %v506 = vadd.f32 %v491, %v505
            %s507 = sld [smem:[#allocation11 + %s499]]
            %s508 = smul.u32 %s486, 8
            %s509 = scalar_lea.vmem [#allocation3], %s508
            %v510 = vld [vmem:[%s509] sm:$0xff]
            %v511 = vstv %s507
            %v512 = vmul.f32 %v511, %v510
            %v513 = vadd.f32 %v492, %v512
          $region84: #{_lambda_.1} parent=76 // loop_footer
            %s488 = sadd.s32 %s486, 1
          $region85: #{_lambda_.1} parent=76 // loop_footer_branch
            %485 = sbr.rel target = $region81
          $region86: #{_lambda_.1} parent=76 // loop_exit
            _
          %vm514 = vcmask 130048
          %v516 = vsel %vm514, %v417, 0
          %v519 = vsel %vm514, %v491, 0
          %521 = vmatprep.subr.mxu0 0.0
          %522 = vmatpush1.xpose.msra.mxu0 %v519
          %523 = vmatprep.subr.mxu0 0.0
          %524 = vmatpush1.xpose.msra.mxu0 0.0
          %525 = vmatprep.subr.mxu0 0.0
          %526 = vmatpush1.xpose.msra.mxu0 0.0
          %527 = vmatprep.subr.mxu0 0.0
          %528 = vmatpush1.xpose.msra.mxu0 0.0
          %529 = vmatprep.subr.mxu0 0.0
          %530 = vmatpush1.xpose.msra.mxu0 0.0
          %531 = vmatprep.subr.mxu0 0.0
          %532 = vmatpush1.xpose.msra.mxu0 0.0
          %533 = vmatprep.subr.mxu0 0.0
          %534 = vmatpush1.xpose.msra.mxu0 0.0
          %535 = vmatprep.subr.mxu0 0.0
          %536 = vmatpush1.xpose.msra.mxu0 0.0
          %537 = vmatprep.subr.mxu0 0.0
          %538 = vmatpush1.xpose.msra.mxu0 0.0
          %539 = vmatprep.subr.mxu0 0.0
          %540 = vmatpush1.xpose.msra.mxu0 0.0
          %541 = vmatprep.subr.mxu0 0.0
          %542 = vmatpush1.xpose.msra.mxu0 0.0
          %543 = vmatprep.subr.mxu0 0.0
          %544 = vmatpush1.xpose.msra.mxu0 0.0
          %545 = vmatprep.subr.mxu0 0.0
          %546 = vmatpush1.xpose.msra.mxu0 0.0
          %547 = vmatprep.subr.mxu0 0.0
          %548 = vmatpush1.xpose.msra.mxu0 0.0
          %549 = vmatprep.subr.mxu0 0.0
          %550 = vmatpush1.xpose.msra.mxu0 0.0
          %551 = vmatprep.subr.mxu0 0.0
          %552 = vmatpush1.xpose.msra.mxu0 0.0
          %553 = vmatprep.subr.mxu0 0.0
          %554 = vmatpush1.xpose.msra.mxu0 0.0
          %555 = vmatprep.subr.mxu0 0.0
          %556 = vmatpush1.xpose.msra.mxu0 0.0
          %557 = vmatprep.subr.mxu0 0.0
          %558 = vmatpush1.xpose.msra.mxu0 0.0
          %559 = vmatprep.subr.mxu0 0.0
          %560 = vmatpush1.xpose.msra.mxu0 0.0
          %561 = vmatprep.subr.mxu0 0.0
          %562 = vmatpush1.xpose.msra.mxu0 0.0
          %563 = vmatprep.subr.mxu0 0.0
          %564 = vmatpush1.xpose.msra.mxu0 0.0
          %565 = vmatprep.subr.mxu0 0.0
          %566 = vmatpush1.xpose.msra.mxu0 0.0
          %567 = vmatprep.subr.mxu0 0.0
          %568 = vmatpush1.xpose.msra.mxu0 0.0
          %569 = vmatprep.subr.mxu0 0.0
          %570 = vmatpush1.xpose.msra.mxu0 0.0
          %571 = vmatprep.subr.mxu0 0.0
          %572 = vmatpush1.xpose.msra.mxu0 0.0
          %573 = vmatprep.subr.mxu0 0.0
          %574 = vmatpush1.xpose.msra.mxu0 0.0
          %575 = vmatprep.subr.mxu0 0.0
          %576 = vmatpush1.xpose.msra.mxu0 0.0
          %577 = vmatprep.subr.mxu0 0.0
          %578 = vmatpush1.xpose.msra.mxu0 0.0
          %579 = vmatprep.subr.mxu0 0.0
          %580 = vmatpush1.xpose.msra.mxu0 0.0
          %581 = vmatprep.subr.mxu0 0.0
          %582 = vmatpush1.xpose.msra.mxu0 0.0
          %583 = vmatprep.subr.mxu0 0.0
          %584 = vmatpush1.xpose.msra.mxu0 0.0
          %585 = vmatprep.mubr.f32.mxu0 0.0
          %586 = vmatmul.mubr.f32.gmra.mrb[0].mxu0 %v516
          %v587 = vpop.f32.mrb[0].mxu0
          %v588 = vadd.f32 0.0, %v587
          %v589 = vpop.f32.mrb[0].mxu0
          %590 = vdwg.mxu0
          %592 = vset.pattern.permute.xlu0 0
          %593 = vperm.xlu0 %592, %v419
          %v594 = vpop.permute.xlu0 %593
          %v596 = vmul.f32 %v588, %v594
          %s597 = smul.u32 %s422, 8
          %s598 = scalar_lea.vmem %s399, %s597
          %v599 = vld [vmem:[%s598] sm:$0xff]
          %vm600 = vcmask 64512
          %v602 = vsel %vm600, %v599, 0
          %604 = vmatprep.subr.mxu0 0.0
          %605 = vmatpush1.msra.mxu0 %v596
          %606 = vmatprep.subr.mxu0 0.0
          %607 = vmatpush1.msra.mxu0 0.0
          %608 = vmatprep.subr.mxu0 0.0
          %609 = vmatpush1.msra.mxu0 0.0
          %610 = vmatprep.subr.mxu0 0.0
          %611 = vmatpush1.msra.mxu0 0.0
          %612 = vmatprep.subr.mxu0 0.0
          %613 = vmatpush1.msra.mxu0 0.0
          %614 = vmatprep.subr.mxu0 0.0
          %615 = vmatpush1.msra.mxu0 0.0
          %616 = vmatprep.subr.mxu0 0.0
          %617 = vmatpush1.msra.mxu0 0.0
          %618 = vmatprep.subr.mxu0 0.0
          %619 = vmatpush1.msra.mxu0 0.0
          %620 = vmatprep.subr.mxu0 0.0
          %621 = vmatpush1.msra.mxu0 0.0
          %622 = vmatprep.subr.mxu0 0.0
          %623 = vmatpush1.msra.mxu0 0.0
          %624 = vmatprep.subr.mxu0 0.0
          %625 = vmatpush1.msra.mxu0 0.0
          %626 = vmatprep.subr.mxu0 0.0
          %627 = vmatpush1.msra.mxu0 0.0
          %628 = vmatprep.subr.mxu0 0.0
          %629 = vmatpush1.msra.mxu0 0.0
          %630 = vmatprep.subr.mxu0 0.0
          %631 = vmatpush1.msra.mxu0 0.0
          %632 = vmatprep.subr.mxu0 0.0
          %633 = vmatpush1.msra.mxu0 0.0
          %634 = vmatprep.subr.mxu0 0.0
          %635 = vmatpush1.msra.mxu0 0.0
          %636 = vmatprep.subr.mxu0 0.0
          %637 = vmatpush1.msra.mxu0 0.0
          %638 = vmatprep.subr.mxu0 0.0
          %639 = vmatpush1.msra.mxu0 0.0
          %640 = vmatprep.subr.mxu0 0.0
          %641 = vmatpush1.msra.mxu0 0.0
          %642 = vmatprep.subr.mxu0 0.0
          %643 = vmatpush1.msra.mxu0 0.0
          %644 = vmatprep.subr.mxu0 0.0
          %645 = vmatpush1.msra.mxu0 0.0
          %646 = vmatprep.subr.mxu0 0.0
          %647 = vmatpush1.msra.mxu0 0.0
          %648 = vmatprep.subr.mxu0 0.0
          %649 = vmatpush1.msra.mxu0 0.0
          %650 = vmatprep.subr.mxu0 0.0
          %651 = vmatpush1.msra.mxu0 0.0
          %652 = vmatprep.subr.mxu0 0.0
          %653 = vmatpush1.msra.mxu0 0.0
          %654 = vmatprep.subr.mxu0 0.0
          %655 = vmatpush1.msra.mxu0 0.0
          %656 = vmatprep.subr.mxu0 0.0
          %657 = vmatpush1.msra.mxu0 0.0
          %658 = vmatprep.subr.mxu0 0.0
          %659 = vmatpush1.msra.mxu0 0.0
          %660 = vmatprep.subr.mxu0 0.0
          %661 = vmatpush1.msra.mxu0 0.0
          %662 = vmatprep.subr.mxu0 0.0
          %663 = vmatpush1.msra.mxu0 0.0
          %664 = vmatprep.subr.mxu0 0.0
          %665 = vmatpush1.msra.mxu0 0.0
          %666 = vmatprep.subr.mxu0 0.0
          %667 = vmatpush1.msra.mxu0 0.0
          %668 = vmatprep.mubr.f32.mxu0 0.0
          %669 = vmatmul.mubr.f32.gmra.mrb[0].mxu0 %v602
          %v670 = vpop.f32.mrb[0].mxu0
          %v671 = vadd.f32 0.0, %v670
          %v672 = vpop.f32.mrb[0].mxu0
          %673 = vdwg.mxu0
          %v674 = vstv %s433
          %v675 = vmul.f32 %v674, %v491
          %v676 = vstv %s435
          %v677 = vmul.f32 %v676, %v671
          %v678 = vlaneseq
          %v679 = vshrl.u32 %v678, 7
          %v680 = vsub.s32 0, %v679
          %v681 = vrot.slane %v675, %v680
          %683 = vset.pattern.permute.xlu0 0
          %684 = vperm.xlu0 %683, %v677
          %v685 = vpop.permute.xlu0 %684
          %v687 = vadd.f32 %v681, %v685
          %vm688 = vcmp.gt.f32.partialorder %v687, 0.0
          %v689 = vmul.f32 %v687, 0.2
          %v690 = vsel %vm688, %v687, %v689
          %v691 = vstv %s437
          %v692 = vmul.f32 %v691, %v671
          %v693 = vadd.f32 %v692, %v492
          %vm694 = vcmp.gt.f32.partialorder %v693, 0.0
          %v695 = vmul.f32 %v693, 0.2
          %v696 = vsel %vm694, %v693, %v695
          %v697 = vstv %s439
          %v698 = vmul.f32 %v697, %v696
          %v699 = vstv %s441
          %v700 = vmul.f32 %v699, %v690
          %702 = vset.pattern.permute.xlu0 0
          %703 = vperm.xlu0 %702, %v698
          %v704 = vpop.permute.xlu0 %703
          %v706 = vadd.f32 %v704, %v700
          %vm707 = vcmp.gt.f32.partialorder %v706, 0.0
          %v708 = vmul.f32 %v706, 0.2
          %v709 = vsel %vm707, %v706, %v708
          %v710 = vsel %vm418, %v709, -9e+15
          %v711 = vsel %vm514, %v710, -inf
          %712 = vmax.xlane.f32.xlu0 %v711
          %v713 = vpop.xlane.xlu0 %712
          %v714 = vsub.f32 %v710, %v713
          %v715 = vmul.f32 %v714, 1.442695
          %v716 = vpow.pop %v715
          %v717 = vsel %vm514, %v716, 0.0
          %718 = vadd.xlane.f32.xlu0 %v717
          %v719 = vpop.xlane.xlu0 %718
          %v720 = vrcp.pop %v719
          %v721 = vmul.f32 %v716, %v720
          %723 = vset.pattern.permute.xlu0 0
          %724 = vperm.xlu0 %723, %v671
          %v725 = vpop.permute.xlu0 %724
          %v727 = vmul.f32 %v721, %v725
          %v728 = vsel %vm514, %v727, 0.0
          %v729 = vrot.slane %v728, 4
          %v730 = vadd.f32 %v728, %v729
          %v731 = vrot.slane %v730, 2
          %v732 = vadd.f32 %v730, %v731
          %v733 = vrot.slane %v732, 1
          %v734 = vadd.f32 %v732, %v733
          %v735 = vlaneseq
          %v736 = vshrl.u32 %v735, 7
          %v737 = vsub.s32 1, %v736
          %v738 = vrot.slane %v675, %v737
          %739 = vset.pattern.permute.xlu0 1
          %740 = vperm.xlu0 %739, %v677
          %v741 = vpop.permute.xlu0 %740
          %v743 = vadd.f32 %v738, %v741
          %vm744 = vcmp.gt.f32.partialorder %v743, 0.0
          %v745 = vmul.f32 %v743, 0.2
          %v746 = vsel %vm744, %v743, %v745
          %v747 = vmul.f32 %v699, %v746
          %748 = vset.pattern.permute.xlu0 1
          %749 = vperm.xlu0 %748, %v698
          %v750 = vpop.permute.xlu0 %749
          %v752 = vadd.f32 %v750, %v747
          %vm753 = vcmp.gt.f32.partialorder %v752, 0.0
          %v754 = vmul.f32 %v752, 0.2
          %v755 = vsel %vm753, %v752, %v754
          %v756 = vsel %vm418, %v755, -9e+15
          %v757 = vsel %vm514, %v756, -inf
          %758 = vmax.xlane.f32.xlu0 %v757
          %v759 = vpop.xlane.xlu0 %758
          %v760 = vsub.f32 %v756, %v759
          %v761 = vmul.f32 %v760, 1.442695
          %v762 = vpow.pop %v761
          %v763 = vsel %vm514, %v762, 0.0
          %764 = vadd.xlane.f32.xlu0 %v763
          %v765 = vpop.xlane.xlu0 %764
          %v766 = vrcp.pop %v765
          %v767 = vmul.f32 %v762, %v766
          %768 = vset.pattern.permute.xlu0 1
          %769 = vperm.xlu0 %768, %v671
          %v770 = vpop.permute.xlu0 %769
          %v772 = vmul.f32 %v767, %v770
          %v773 = vsel %vm514, %v772, 0.0
          %v774 = vrot.slane %v773, 4
          %v775 = vadd.f32 %v773, %v774
          %v776 = vrot.slane %v775, 2
          %v777 = vadd.f32 %v775, %v776
          %v778 = vrot.slane %v777, 1
          %v779 = vadd.f32 %v777, %v778
          %vm780 = vcmask 1040384
          %v781 = vsel %vm780, %v734, %v779
          %s782 = scalar_lea.vmem %s404, %s448
          %783 = vst.msk [vmem:[%s782] sm:$0x3] %vm405, %v781
          %s784 = sadd.s32 %s422, 1
          %s785 = scvt.s32.f32 %s784
          %vm786 = vcmp.gt.f32.partialorder %v452, 0.0
          %v787 = vsel %vm786, 0.0, 1.0
          %v788 = vstv %s785
          %v789 = vadd.f32 %v450, %v788
          %v790 = vmul.f32 %v789, %v452
          %v791 = vadd.f32 %v781, %v788
          %v792 = vmul.f32 %v791, %v787
          %v793 = vadd.f32 %v790, %v792
          %v794 = vsel %vm405, %v793, 0.0
          %v795 = vrot.slane %v794, 4
          %v796 = vadd.f32 %v794, %v795
          %v797 = vrot.slane %v796, 2
          %v798 = vadd.f32 %v796, %v797
          %v799 = vrot.slane %v798, 1
          %v800 = vadd.f32 %v798, %v799
          %v801 = vrcp.pop 2.0
          %v802 = vmul.f32 %v800, %v801
          %v803 = vsub.f32 %v793, %v802
          %v804 = vmul.f32 %v803, %v803
          %v805 = vsel %vm405, %v804, 0.0
          %v806 = vrot.slane %v805, 4
          %v807 = vadd.f32 %v805, %v806
          %v808 = vrot.slane %v807, 2
          %v809 = vadd.f32 %v807, %v808
          %v810 = vrot.slane %v809, 1
          %v811 = vadd.f32 %v809, %v810
          %v812 = vmul.f32 %v811, %v801
          %v813 = vadd.f32 %v812, 1e-05
          %v814 = vrsqrt.pop %v813
          %v815 = vmul.f32 %v803, %v814
          %s816 = smul.u32 %s422, 2
          %s817 = scalar_lea.vmem [#allocation2], %s816
          %818 = vst.msk [vmem:[%s817] sm:$0x3] %vm405, %v815
          %s819 = scalar_lea.vmem [#allocation3], %s597
          %820 = vst.msk [vmem:[%s819] sm:$0xff] %vm410, %v671
          %v821 = vsel %vm405, %v781, 0.0
          %822 = vadd.xlane.f32.xlu0 %v821
          %v823 = vpop.xlane.xlu0 %822
          %vm824 = vcmask 1041408
          %v825 = vsel %vm824, %v823, 0.0
          %v826 = vrot.slane %v825, 4
          %v827 = vadd.f32 %v825, %v826
          %v828 = vrot.slane %v827, 2
          %v829 = vadd.f32 %v827, %v828
          %v830 = vrot.slane %v829, 1
          %v831 = vadd.f32 %v829, %v830
          %v832 = vmul.f32 %v831, 0.03125
          %833 = vst.msk [vmem:[#allocation4] sm:$0x1] %vm415, %v832
        $region77: #{_lambda_.1} parent=55 // loop_footer
          %s426 = sadd.s32 1, %s422
        $region78: #{_lambda_.1} parent=55 // loop_footer_branch
          %421 = sbr.rel target = $region74
        $region79: #{_lambda_.1} parent=55 // loop_exit
          _
        %p834 = scmp.lt.s32.totalorder %s26, 1
        %s835 = scalar_select %p834, %s26, 1
        %s836 = smul.addr %s835, 4
        %s837 = smul.addr %s836, 2
        %s838 = scalar_lea.vmem %s9, %s837
        // Predicated region
        $region87: #{_lambda_.1} parent=55 // pred_check
          %p839 = pneg %p243
        $region88: #{_lambda_.1} parent=55 // pred_check_branch
          %841 = sbr.rel (%p839) target = $region90
        $region89: #{_lambda_.1} parent=55 // pred_region
          _
        $region90: #{_lambda_.1} parent=55 // pred_fallthru
          _
      $region56: #{_lambda_.1} parent=5 // pred_fallthru
        _
      %p842 = scmp.le.s32.totalorder 2, %s21
      // Predicated region
      $region91: #{_lambda_.1} parent=5 // pred_check
        %p843 = pneg %p842
      $region92: #{_lambda_.1} parent=5 // pred_check_branch
        %845 = sbr.rel (%p843) target = $region94
      $region93: #{_lambda_.1} parent=5 // pred_region
        %s846 = ssub.s32 %s21, 2
        // Predicated region
        $region95: #{_lambda_.1} parent=93 // pred_check
          %p847 = pneg %p249
        $region96: #{_lambda_.1} parent=93 // pred_check_branch
          %849 = sbr.rel (%p847) target = $region98
        $region97: #{_lambda_.1} parent=93 // pred_region
          %p850 = scmp.lt.s32.totalorder %s27, 1
          %s851 = scalar_select %p850, %s27, 1
          %s852 = smul.addr %s851, 4
          %s853 = smul.addr %s852, 2
          %s854 = scalar_lea.vmem %s9, %s853
        $region98: #{_lambda_.1} parent=93 // pred_fallthru
          _
      $region94: #{_lambda_.1} parent=5 // pred_fallthru
        _
    $region6: #{_lambda_.1} parent=1 // loop_footer
      %s25 = sadd.s32 1, %s21
    $region7: #{_lambda_.1} parent=1 // loop_footer_branch
      %20 = sbr.rel target = $region3
    $region8: #{_lambda_.1} parent=1 // loop_exit
      _
    %855 = vsyncpa [#allocation6], 1
    %s856 = scalar_lea.sflag [#allocation6], 1
    %857 = vsyncpa %s856, 1
    %858 = vsyncpa [#allocation7], 1
    %s859 = scalar_lea.sflag [#allocation7], 1
    %860 = vsyncpa %s859, 1
    %861 = vsyncpa [#allocation8], 1
    %s862 = scalar_lea.sflag [#allocation8], 1
    %863 = vsyncpa %s862, 1
    %864 = vsyncpa [#allocation12], 1

</llo_original>
